<compile_context>
chip_gen: v6e
topology: v6e:2x2x1
jax: 0.10.0
libtpu: 0.0.40
codegen_flags: <defaults>
</compile_context>

<pallas_src>
import functools

import jax
import jax.numpy as jnp
from jax import lax
from jax.experimental import pallas as pl
from jax.experimental.pallas import tpu as pltpu

_BN_EPS = 1e-5


def _bnr_kernel(vec_ref, ones_ref, lab_ref, bn_ref, out_ref, norm_ref, *,
                n_valid, precision):
    i = pl.program_id(0)
    num_tiles = pl.num_programs(0)

    @pl.when(i == 0)
    def _init():
        out_ref[...] = jnp.zeros_like(out_ref)

    # ---- streaming stage: per-row L2 norm for this tile (MXU + EUP) ----
    v = vec_ref[...]
    if v.dtype != ones_ref.dtype:
        # Non-bf16/non-f32 inputs are promoted; bf16 squares stay in bf16
        # (MXU accumulates in f32 via preferred_element_type).
        v = v.astype(ones_ref.dtype)
    vsq = v * v
    # Contract D of both operands: C[r, n] = sum_d vsq[n, d] -> (8, TILE_N).
    # Result is already lane-dense (batch rows on lanes); row 0 is used.
    ssq = lax.dot_general(ones_ref[...], vsq, (((1,), (1,)), ((), ())),
                          preferred_element_type=jnp.float32,
                          precision=precision)
    # sqrt here (HBM-bound loop -> EUP slack) to thin the serialized finalize.
    norm_ref[pl.ds(i, 1), :] = jnp.sqrt(ssq[0:1, :])

    # ---- last step: BatchNorm1d(1) + sigmoid focal loss over all rows ----
    @pl.when(i == num_tiles - 1)
    def _finalize():
        nt, tn = norm_ref.shape
        row = lax.broadcasted_iota(jnp.int32, (nt, tn), 0)
        col = lax.broadcasted_iota(jnp.int32, (nt, tn), 1)
        valid = (row * tn + col) < n_valid                  # mask padded rows
        inv_n = 1.0 / n_valid

        norms = jnp.where(valid, norm_ref[...], 0.0)        # (nt, tn)

        # Training-mode batch norm: batch mean, biased variance, eps=1e-5.
        mean = jnp.sum(norms) * inv_n
        centered = jnp.where(valid, norms - mean, 0.0)
        var = jnp.sum(centered * centered) * inv_n
        x_hat = centered * lax.rsqrt(var + _BN_EPS)
        dist = x_hat * bn_ref[0:1, 0:1] + bn_ref[0:1, 1:2]  # logits

        # binaries = labels.clamp(0, 1)
        t = jnp.clip(lab_ref[...], 0.0, 1.0)

        # sigmoid_focal_loss(dist, t, alpha=-1, gamma=2, reduction='mean'),
        # reusing e = exp(-|dist|) for both the stable BCE term and sigmoid.
        e = jnp.exp(-jnp.abs(dist))
        inv_1pe = pl.reciprocal(1.0 + e, approx=True)
        p = jnp.where(dist >= 0.0, 1.0, e) * inv_1pe        # sigmoid(dist)
        ce = jnp.maximum(dist, 0.0) - dist * t + jnp.log1p(e)
        p_t = p * t + (1.0 - p) * (1.0 - t)
        one_m_pt = 1.0 - p_t
        loss = ce * one_m_pt * one_m_pt                     # alpha<0 -> no alpha term

        total = jnp.sum(jnp.where(valid, loss, 0.0)) * inv_n
        out_ref[...] = jnp.reshape(total, (1, 1))


def _pick_tile_n(n, d, itemsize):
    # Size the tile by BYTES: target ~4 MiB per (TILE_N, D) vectors tile
    # (>=85% of HBM roofline per measured streaming data), multiple of 128
    # rows, capped at 8192 rows for tiny D and at the (padded) batch size.
    tile_budget = 4 * 1024 * 1024
    t = tile_budget // max(1, d * itemsize)
    t = max(128, min(8192, (t // 128) * 128))
    n_pad128 = ((n + 127) // 128) * 128
    return min(t, max(128, n_pad128))


def bnr_loss(vectors, labels, gamma, beta, *, tile_n=None):
    """Pallas implementation of BackgroundNoiseReductionLoss.forward."""
    n, d = vectors.shape
    itemsize = jnp.dtype(vectors.dtype).itemsize
    if tile_n is None:
        tile_n = _pick_tile_n(n, d, itemsize)
    num_tiles = pl.cdiv(n, tile_n)
    n_pad = num_tiles * tile_n

    # bf16 inputs keep their square in bf16 (bf16 VALU on v6e/v7x); everything
    # else is squared in f32. f32 matmuls use HIGHEST precision (free here).
    if vectors.dtype == jnp.bfloat16:
        compute_dtype = jnp.bfloat16
        precision = lax.Precision.DEFAULT
    else:
        compute_dtype = jnp.float32
        precision = lax.Precision.HIGHEST
    compute_itemsize = jnp.dtype(compute_dtype).itemsize

    # Lane-dense labels: (num_tiles, TILE_N) f32, zero-padded (padded rows are
    # masked in-kernel). Tiny; `vectors` is neither padded nor upcast on host.
    lab = jnp.zeros((n_pad,), jnp.float32).at[:n].set(labels.astype(jnp.float32))
    lab2d = lab.reshape(num_tiles, tile_n)

    # Resident MXU LHS (hoisted out of the per-step body).
    ones_lhs = jnp.ones((8, d), compute_dtype)

    bn_params = jnp.stack([
        jnp.asarray(gamma, jnp.float32).reshape(()),
        jnp.asarray(beta, jnp.float32).reshape(()),
    ]).reshape(1, 2)

    kernel = functools.partial(_bnr_kernel, n_valid=n, precision=precision)

    # VMEM accounting: double-buffered vectors tiles, in-kernel v/vsq temps,
    # resident ones/labels (double-buffered), norms scratch, headroom.
    vmem_bytes = int(
        2 * tile_n * d * itemsize              # pipelined vectors tiles
        + 2 * tile_n * d * compute_itemsize    # in-kernel (cast +) vsq temps
        + 2 * 8 * d * compute_itemsize         # resident ones LHS
        + 2 * n_pad * 4                        # resident labels
        + n_pad * 4                            # norms scratch
        + (4 << 20))                           # headroom / epilogue temps
    vmem_bytes = min(vmem_bytes, 64 << 20)     # stay v7x-physical-safe

    out = pl.pallas_call(
        kernel,
        out_shape=jax.ShapeDtypeStruct((1, 1), jnp.float32),
        grid=(num_tiles,),
        in_specs=[
            pl.BlockSpec((tile_n, d), lambda i: (i, 0)),            # vectors tile
            pl.BlockSpec((8, d), lambda i: (0, 0)),                 # ones LHS
            pl.BlockSpec((num_tiles, tile_n), lambda i: (0, 0)),    # labels (resident)
            pl.BlockSpec((1, 2), lambda i: (0, 0)),                 # (gamma, beta)
        ],
        out_specs=pl.BlockSpec((1, 1), lambda i: (0, 0)),
        scratch_shapes=[pltpu.VMEM((num_tiles, tile_n), jnp.float32)],
        compiler_params=pltpu.CompilerParams(
            dimension_semantics=("arbitrary",),
            vmem_limit_bytes=vmem_bytes),
    )(vectors, ones_lhs, lab2d, bn_params)
    return out[0, 0]


def bnr_loss_ref(vectors, labels, gamma, beta):
    """Pure-JAX reference mirroring the PyTorch module."""
    v = vectors.astype(jnp.float32)
    norms = jnp.sqrt(jnp.sum(v * v, axis=1, keepdims=True))
    mean = jnp.mean(norms)
    var = jnp.mean((norms - mean) ** 2)
    g = jnp.asarray(gamma, jnp.float32).reshape(())
    b = jnp.asarray(beta, jnp.float32).reshape(())
    dist = (g * (norms - mean) / jnp.sqrt(var + _BN_EPS) + b).reshape(-1)
    t = jnp.clip(labels.astype(jnp.float32), 0.0, 1.0)
    p = jax.nn.sigmoid(dist)
    ce = jnp.maximum(dist, 0.0) - dist * t + jnp.log1p(jnp.exp(-jnp.abs(dist)))
    p_t = p * t + (1.0 - p) * (1.0 - t)
    return jnp.mean(ce * (1.0 - p_t) ** 2)


if __name__ == "__main__":
    key = jax.random.PRNGKey(0)
    kv, kl = jax.random.split(key)

    N, D = 512, 256  # small: 512 embedding vectors, hidden dim 256
    vectors = jax.random.normal(kv, (N, D), dtype=jnp.float32)
    # labels include negatives (background) so clamp(0, 1) is exercised
    labels = jax.random.randint(kl, (N,), minval=-1, maxval=2).astype(jnp.float32)

    # MomentumBatchNorm(1) affine params, deterministic init (weight=1, bias=0).
    # TODO(synk): MomentumBatchNorm's running-statistic momentum update is a
    # buffer side effect, not part of the training-mode forward math; only the
    # batch-statistic normalization is modeled here.
    gamma = jnp.ones((1,), dtype=jnp.float32)
    beta = jnp.zeros((1,), dtype=jnp.float32)

    # tile_n=128 -> 4 pipelined grid steps at this small demo size (production
    # sizes pick TILE_N by the ~4 MiB byte budget automatically).
    out = bnr_loss(vectors, labels, gamma, beta, tile_n=128)
    jax.block_until_ready(out)

    ref = bnr_loss_ref(vectors, labels, gamma, beta)
    # Approximate EUP reciprocal in the sigmoid epilogue -> small tolerance.
    assert jnp.allclose(out, ref, rtol=5e-3, atol=1e-4), (out, ref)

    print("KERNEL_OK")
</pallas_src>

<mosaic_0001>
module attributes {stable_mosaic.version = 11 : i64} {
  func.func @_bnr_kernel(%arg0: i32, %arg1: memref<128x256xf32, #tpu.memory_space<vmem>>, %arg2: memref<8x256xf32, #tpu.memory_space<vmem>>, %arg3: memref<4x128xf32, #tpu.memory_space<vmem>>, %arg4: memref<1x2xf32, #tpu.memory_space<vmem>>, %arg5: memref<1x1xf32, #tpu.memory_space<vmem>>, %arg6: memref<4x128xf32, #tpu.memory_space<vmem>>) attributes {dimension_semantics = [#tpu.dimension_semantics<arbitrary>], iteration_bounds = array<i64: 4>, scalar_prefetch = 0 : i64, scratch_operands = 1 : i64, tpu.core_type = #tpu.core_type<tc>, window_params = [{transform_indices = @transform_0, window_bounds = array<i64: 128, 256>}, {pipeline_mode = #tpu.pipeline_mode<synchronous>, transform_indices = @transform_1, window_bounds = array<i64: 8, 256>}, {pipeline_mode = #tpu.pipeline_mode<synchronous>, transform_indices = @transform_2, window_bounds = array<i64: 4, 128>}, {pipeline_mode = #tpu.pipeline_mode<synchronous>, transform_indices = @transform_3, window_bounds = array<i64: 1, 2>}, {pipeline_mode = #tpu.pipeline_mode<synchronous>, transform_indices = @transform_4, window_bounds = array<i64: 1, 1>}]} {
    %c0_i32 = arith.constant 0 : i32
    %0 = arith.cmpi eq, %arg0, %c0_i32 : i32
    %1 = arith.extui %0 : i1 to i32
    %c0_i32_0 = arith.constant 0 : i32
    %2 = arith.cmpi ne, %1, %c0_i32_0 : i32
    scf.if %2 {
      %cst_6 = arith.constant 0.000000e+00 : f32
      %14 = vector.broadcast %cst_6 : f32 to vector<1x1xf32>
      %c0_7 = arith.constant 0 : index
      %c0_8 = arith.constant 0 : index
      %15 = vector.load %arg5[%c0_7, %c0_8] : memref<1x1xf32, #tpu.memory_space<vmem>>, vector<1x1xf32>
      tpu.vector_store %arg5[%c0_7, %c0_8], %14 {strides = array<i32>} : memref<1x1xf32, #tpu.memory_space<vmem>>, vector<1x1xf32>,
    } else {
    }
    %c0 = arith.constant 0 : index
    %c0_1 = arith.constant 0 : index
    %3 = vector.load %arg1[%c0, %c0_1] : memref<128x256xf32, #tpu.memory_space<vmem>>, vector<128x256xf32>
    %4 = arith.mulf %3, %3 : vector<128x256xf32>
    %c0_2 = arith.constant 0 : index
    %c0_3 = arith.constant 0 : index
    %5 = vector.load %arg2[%c0_2, %c0_3] : memref<8x256xf32, #tpu.memory_space<vmem>>, vector<8x256xf32>
    %cst = arith.constant dense<0.000000e+00> : vector<8x128xf32>
    %6 = tpu.matmul %5, %4, %cst {dimension_numbers = #tpu.dot_dimension_numbers<[1], [1], [0], [0], [0, 0, 1, 0], [], []>, precision = #tpu.contract_precision<fp32>} : vector<8x256xf32>, vector<128x256xf32>, vector<8x128xf32> -> vector<8x128xf32>
    %7 = vector.extract_strided_slice %6 {offsets = [0, 0], sizes = [1, 128], strides = [1, 1]} : vector<8x128xf32> to vector<1x128xf32>
    %8 = math.sqrt %7 : vector<1x128xf32>
    %9 = arith.index_cast %arg0 : i32 to index
    %c0_4 = arith.constant 0 : index
    %10 = vector.load %arg6[%9, %c0_4] : memref<4x128xf32, #tpu.memory_space<vmem>>, vector<1x128xf32>
    tpu.vector_store %arg6[%9, %c0_4], %8 {strides = array<i32>} : memref<4x128xf32, #tpu.memory_space<vmem>>, vector<1x128xf32>,
    %c3_i32 = arith.constant 3 : i32
    %11 = arith.cmpi eq, %arg0, %c3_i32 : i32
    %12 = arith.extui %11 : i1 to i32
    %c0_i32_5 = arith.constant 0 : i32
    %13 = arith.cmpi ne, %12, %c0_i32_5 : i32
    scf.if %13 {
      %14 = tpu.iota {dimensions = array<i32: 0>} : vector<4x128xi32>
      %15 = tpu.iota {dimensions = array<i32: 1>} : vector<4x128xi32>
      %c128_i32 = arith.constant 128 : i32
      %16 = vector.broadcast %c128_i32 : i32 to vector<4x128xi32>
      %17 = arith.muli %14, %16 : vector<4x128xi32>
      %18 = arith.addi %17, %15 : vector<4x128xi32>
      %c512_i32 = arith.constant 512 : i32
      %19 = vector.broadcast %c512_i32 : i32 to vector<4x128xi32>
      %20 = arith.cmpi slt, %18, %19 : vector<4x128xi32>
      %c0_6 = arith.constant 0 : index
      %c0_7 = arith.constant 0 : index
      %21 = vector.load %arg6[%c0_6, %c0_7] : memref<4x128xf32, #tpu.memory_space<vmem>>, vector<4x128xf32>
      %cst_8 = arith.constant 0.000000e+00 : f32
      %22 = vector.broadcast %cst_8 : f32 to vector<4x128xf32>
      %23 = arith.select %20, %21, %22 : vector<4x128xi1>, vector<4x128xf32>
      %24 = vector.shape_cast %23 : vector<4x128xf32> to vector<1x4x128xf32>
      %cst_9 = arith.constant dense<0.000000e+00> : vector<1xf32>
      %25 = vector.multi_reduction <add>, %24, %cst_9 [1, 2] : vector<1x4x128xf32> to vector<1xf32>
      %26 = vector.shape_cast %25 : vector<1xf32> to vector<1x1x1xf32>
      %27 = vector.extract %26[0, 0, 0] : f32 from vector<1x1x1xf32>
      %cst_10 = arith.constant 0.001953125 : f32
      %28 = arith.mulf %27, %cst_10 : f32
      %29 = vector.broadcast %28 : f32 to vector<4x128xf32>
      %30 = arith.subf %23, %29 : vector<4x128xf32>
      %cst_11 = arith.constant 0.000000e+00 : f32
      %31 = vector.broadcast %cst_11 : f32 to vector<4x128xf32>
      %32 = arith.select %20, %30, %31 : vector<4x128xi1>, vector<4x128xf32>
      %33 = arith.mulf %32, %32 : vector<4x128xf32>
      %34 = vector.shape_cast %33 : vector<4x128xf32> to vector<1x4x128xf32>
      %cst_12 = arith.constant dense<0.000000e+00> : vector<1xf32>
      %35 = vector.multi_reduction <add>, %34, %cst_12 [1, 2] : vector<1x4x128xf32> to vector<1xf32>
      %36 = vector.shape_cast %35 : vector<1xf32> to vector<1x1x1xf32>
      %37 = vector.extract %36[0, 0, 0] : f32 from vector<1x1x1xf32>
      %cst_13 = arith.constant 0.001953125 : f32
      %38 = arith.mulf %37, %cst_13 : f32
      %cst_14 = arith.constant 9.99999974E-6 : f32
      %39 = arith.addf %38, %cst_14 : f32
      %40 = math.rsqrt %39 : f32
      %41 = vector.broadcast %40 : f32 to vector<4x128xf32>
      %42 = arith.mulf %32, %41 : vector<4x128xf32>
      %c0_15 = arith.constant 0 : index
      %c0_16 = arith.constant 0 : index
      %43 = vector.load %arg4[%c0_15, %c0_16] : memref<1x2xf32, #tpu.memory_space<vmem>>, vector<1x1xf32>
      %44 = vector.broadcast %43 : vector<1x1xf32> to vector<4x128xf32>
      %45 = arith.mulf %42, %44 : vector<4x128xf32>
      %c0_17 = arith.constant 0 : index
      %c1 = arith.constant 1 : index
      %46 = vector.load %arg4[%c0_17, %c1] : memref<1x2xf32, #tpu.memory_space<vmem>>, vector<1x1xf32>
      %47 = vector.broadcast %46 : vector<1x1xf32> to vector<4x128xf32>
      %48 = arith.addf %45, %47 : vector<4x128xf32>
      %c0_18 = arith.constant 0 : index
      %c0_19 = arith.constant 0 : index
      %49 = vector.load %arg3[%c0_18, %c0_19] : memref<4x128xf32, #tpu.memory_space<vmem>>, vector<4x128xf32>
      %cst_20 = arith.constant 0.000000e+00 : f32
      %cst_21 = arith.constant 1.000000e+00 : f32
      %50 = vector.broadcast %cst_20 : f32 to vector<4x128xf32>
      %51 = arith.maximumf %50, %49 : vector<4x128xf32>
      %52 = vector.broadcast %cst_21 : f32 to vector<4x128xf32>
      %53 = arith.minimumf %52, %51 : vector<4x128xf32>
      %54 = math.absf %48 : vector<4x128xf32>
      %cst_22 = arith.constant 0.000000e+00 : f32
      %55 = vector.broadcast %cst_22 : f32 to vector<4x128xf32>
      %56 = arith.subf %55, %54 : vector<4x128xf32>
      %57 = math.exp %56 : vector<4x128xf32>
      %cst_23 = arith.constant 1.000000e+00 : f32
      %58 = vector.broadcast %cst_23 : f32 to vector<4x128xf32>
      %59 = arith.addf %58, %57 : vector<4x128xf32>
      %60 = tpu.reciprocal %59 {approx = true} : vector<4x128xf32> -> vector<4x128xf32>
      %cst_24 = arith.constant 0.000000e+00 : f32
      %61 = vector.broadcast %cst_24 : f32 to vector<4x128xf32>
      %62 = arith.cmpf oge, %48, %61 : vector<4x128xf32>
      %cst_25 = arith.constant 1.000000e+00 : f32
      %63 = vector.broadcast %cst_25 : f32 to vector<4x128xf32>
      %64 = arith.select %62, %63, %57 : vector<4x128xi1>, vector<4x128xf32>
      %65 = arith.mulf %64, %60 : vector<4x128xf32>
      %cst_26 = arith.constant 0.000000e+00 : f32
      %66 = vector.broadcast %cst_26 : f32 to vector<4x128xf32>
      %67 = arith.maximumf %48, %66 : vector<4x128xf32>
      %68 = arith.mulf %48, %53 : vector<4x128xf32>
      %69 = arith.subf %67, %68 : vector<4x128xf32>
      %70 = math.log1p %57 : vector<4x128xf32>
      %71 = arith.addf %69, %70 : vector<4x128xf32>
      %72 = arith.mulf %65, %53 : vector<4x128xf32>
      %cst_27 = arith.constant 1.000000e+00 : f32
      %73 = vector.broadcast %cst_27 : f32 to vector<4x128xf32>
      %74 = arith.subf %73, %65 : vector<4x128xf32>
      %cst_28 = arith.constant 1.000000e+00 : f32
      %75 = vector.broadcast %cst_28 : f32 to vector<4x128xf32>
      %76 = arith.subf %75, %53 : vector<4x128xf32>
      %77 = arith.mulf %74, %76 : vector<4x128xf32>
      %78 = arith.addf %72, %77 : vector<4x128xf32>
      %cst_29 = arith.constant 1.000000e+00 : f32
      %79 = vector.broadcast %cst_29 : f32 to vector<4x128xf32>
      %80 = arith.subf %79, %78 : vector<4x128xf32>
      %81 = arith.mulf %71, %80 : vector<4x128xf32>
      %82 = arith.mulf %81, %80 : vector<4x128xf32>
      %cst_30 = arith.constant 0.000000e+00 : f32
      %83 = vector.broadcast %cst_30 : f32 to vector<4x128xf32>
      %84 = arith.select %20, %82, %83 : vector<4x128xi1>, vector<4x128xf32>
      %85 = vector.shape_cast %84 : vector<4x128xf32> to vector<1x4x128xf32>
      %cst_31 = arith.constant dense<0.000000e+00> : vector<1xf32>
      %86 = vector.multi_reduction <add>, %85, %cst_31 [1, 2] : vector<1x4x128xf32> to vector<1xf32>
      %87 = vector.shape_cast %86 : vector<1xf32> to vector<1x1x1xf32>
      %88 = vector.extract %87[0, 0, 0] : f32 from vector<1x1x1xf32>
      %cst_32 = arith.constant 0.001953125 : f32
      %89 = arith.mulf %88, %cst_32 : f32
      %90 = vector.broadcast %89 : f32 to vector<1x1xf32>
      %c0_33 = arith.constant 0 : index
      %c0_34 = arith.constant 0 : index
      %91 = vector.load %arg5[%c0_33, %c0_34] : memref<1x1xf32, #tpu.memory_space<vmem>>, vector<1x1xf32>
      tpu.vector_store %arg5[%c0_33, %c0_34], %90 {strides = array<i32>} : memref<1x1xf32, #tpu.memory_space<vmem>>, vector<1x1xf32>,
    } else {
    }
    return
  }
  func.func @transform_0(%arg0: i32) -> (i32, i32) {
    %c0_i32 = arith.constant 0 : i32
    %c0_i32_0 = arith.constant 0 : i32
    return %arg0, %c0_i32 : i32, i32
  }
  func.func @transform_1(%arg0: i32) -> (i32, i32) {
    %c0_i32 = arith.constant 0 : i32
    %c0_i32_0 = arith.constant 0 : i32
    %c0_i32_1 = arith.constant 0 : i32
    return %c0_i32, %c0_i32_0 : i32, i32
  }
  func.func @transform_2(%arg0: i32) -> (i32, i32) {
    %c0_i32 = arith.constant 0 : i32
    %c0_i32_0 = arith.constant 0 : i32
    %c0_i32_1 = arith.constant 0 : i32
    return %c0_i32, %c0_i32_0 : i32, i32
  }
  func.func @transform_3(%arg0: i32) -> (i32, i32) {
    %c0_i32 = arith.constant 0 : i32
    %c0_i32_0 = arith.constant 0 : i32
    %c0_i32_1 = arith.constant 0 : i32
    return %c0_i32, %c0_i32_0 : i32, i32
  }
  func.func @transform_4(%arg0: i32) -> (i32, i32) {
    %c0_i32 = arith.constant 0 : i32
    %c0_i32_0 = arith.constant 0 : i32
    %c0_i32_1 = arith.constant 0 : i32
    return %c0_i32, %c0_i32_0 : i32, i32
  }
}

</mosaic_0001>

<llo_original>
// kernel: tpu_custom_call.1
$region0: #{tpu_custom_call.1}
  #allocation0 [shape = 'u32[]', space=smem, size = 0x4, offset = 0x4, fixed_abs, tag = 'smem constant byte address 0x4 - core index']
  #allocation1 [shape = 'u32[144,128]{1,0:T(1,128)}', space=vmem, size = 0x12000, scoped, tag = 'internal scratch']
  #allocation2 [shape = 'f32[4,128]{1,0:T(4,128)}', space=vmem, size = 0x800, scoped, tag = 'scratch operand']
  %s0 = inlined_call_operand.hbm [shape: f32[512,256], index: 0, kind: input, shape index: {}]
  %s1 = inlined_call_operand.hbm [shape: f32[8,256], index: 1, kind: input, shape index: {}]
  %s2 = inlined_call_operand.hbm [shape: f32[4,128], index: 2, kind: input, shape index: {}]
  %s3 = inlined_call_operand.vmem [shape: f32[1,2], index: 3, kind: input, shape index: {}]
  %s4 = inlined_call_operand.hbm [shape: f32[1,1], index: 4, kind: output, shape index: {}]
  %s5 = sld [smem:[#allocation0]]
  $region69: #{tpu_custom_call.1} parent=0
    _
  %s7 = ssub.s32 1, %s5
  %s8 = scalar_select 0, %s7, %s5
  $region1: #{tpu_custom_call.1} parent=0
    #allocation3 [shape = 'u8[262144]{0}', space=vmem, size = 0x40000, scoped, tag = 'input window, operand 0']
    #allocation4 [shape = 's32[2]{0}', space=sflag, size = 0x8, scoped, tag = 'scoped memory for tpu_custom_call.1']
    #allocation5 [shape = 's32[2]{0}', space=sflag, size = 0x8, scoped, tag = 'scoped memory for tpu_custom_call.1']
    #allocation6 [shape = 'u8[8192]{0}', space=vmem, size = 0x2000, scoped, tag = 'input window, operand 1, single buffered']
    #allocation7 [shape = 's32[1]{0}', space=sflag, size = 0x4, scoped, tag = 'scoped memory for tpu_custom_call.1']
    #allocation8 [shape = 'u8[2048]{0}', space=vmem, size = 0x800, scoped, tag = 'input window, operand 2, single buffered']
    #allocation9 [shape = 'u8[512]{0}', space=vmem, size = 0x400, scoped, tag = 'output window, operand 0, single buffered']
    %9 = vsyncpa [#allocation4], 0
    %s10 = scalar_lea.sflag [#allocation4], 1
    %11 = vsyncpa %s10, 0
    %12 = vsyncpa [#allocation7], 0
    %13 = vsyncpa [#allocation5], 0
    loop: start=0, step=1, limit=6
    $region2: #{tpu_custom_call.1} parent=1 // loop_pre_header
      _
    $region3: #{tpu_custom_call.1} parent=1 // loop_header
      %s15 = sphi 0, %s19
      %p16 = scmp.ge.s32.totalorder %s15, 6
      %s25 = sphi 0, %s27
      %s28 = sphi 0, %s25
      %s29 = sphi 0, %s28
      %s45 = sphi 0, %s29
      %s49 = sphi 0, %s49
      %s51 = sphi 0, %s49
      %s52 = sphi 0, %s51
      %s66 = sphi 0, %s52
      %s70 = sphi 0, %s70
      %s72 = sphi 0, %s70
      %s73 = sphi 0, %s72
      %s87 = sphi 0, %s73
      %s91 = sphi 0, %s91
      %s93 = sphi 0, %s91
      %s94 = sphi 0, %s93
      %s108 = sphi 0, %s94
      %s112 = sphi 0, %s112
      %s114 = sphi 0, %s112
      %s115 = sphi 0, %s114
      %s129 = sphi 0, %s115
    $region4: #{tpu_custom_call.1} parent=1 // loop_header_branch
      %18 = sbr.rel (%p16) target = $region8
    $region5: #{tpu_custom_call.1} parent=1 // loop_body
      %s20 = ssub.s32 %s15, 1
      %s21 = ssub.s32 %s15, 2
      %s22 = sadd.s32 %s15, 1
      %s23 = ssub.s32 %s15, %s22
      %p24 = scmp.eq.s32.totalorder %s23, 0
      %s26 = sadd.s32 %s25, 1
      %s27 = scalar_select %p24, %s25, %s26
      %p30 = pneg %p24
      %p31 = scmp.eq.s32.totalorder %s15, 3
      %p32 = por %p30, %p31
      %p33 = scmp.ne.s32.totalorder %s25, %s28
      %p34 = scmp.eq.s32.totalorder %s15, 0
      %p35 = por %p33, %p34
      %p36 = scmp.ne.s32.totalorder %s25, %s28
      %p37 = scmp.eq.s32.totalorder %s20, 3
      %p38 = por %p36, %p37
      %p39 = scmp.ne.s32.totalorder %s28, %s29
      %p40 = scmp.eq.s32.totalorder %s20, 0
      %p41 = por %p39, %p40
      %p42 = scmp.ne.s32.totalorder %s28, %s29
      %p43 = scmp.eq.s32.totalorder %s21, 3
      %p44 = por %p42, %p43
      %p46 = scmp.ne.s32.totalorder %s29, %s45
      %p47 = scmp.eq.s32.totalorder %s21, 0
      %p48 = por %p46, %p47
      %s50 = sadd.s32 %s49, 1
      %p53 = scmp.eq.s32.totalorder %s15, 3
      %p54 = scmp.ne.s32.totalorder %s49, %s51
      %p55 = scmp.eq.s32.totalorder %s15, 0
      %p56 = por %p54, %p55
      %p57 = scmp.ne.s32.totalorder %s49, %s51
      %p58 = scmp.eq.s32.totalorder %s20, 3
      %p59 = por %p57, %p58
      %p60 = scmp.ne.s32.totalorder %s51, %s52
      %p61 = scmp.eq.s32.totalorder %s20, 0
      %p62 = por %p60, %p61
      %p63 = scmp.ne.s32.totalorder %s51, %s52
      %p64 = scmp.eq.s32.totalorder %s21, 3
      %p65 = por %p63, %p64
      %p67 = scmp.ne.s32.totalorder %s52, %s66
      %p68 = scmp.eq.s32.totalorder %s21, 0
      %p69 = por %p67, %p68
      %s71 = sadd.s32 %s70, 1
      %p74 = scmp.eq.s32.totalorder %s15, 3
      %p75 = scmp.ne.s32.totalorder %s70, %s72
      %p76 = scmp.eq.s32.totalorder %s15, 0
      %p77 = por %p75, %p76
      %p78 = scmp.ne.s32.totalorder %s70, %s72
      %p79 = scmp.eq.s32.totalorder %s20, 3
      %p80 = por %p78, %p79
      %p81 = scmp.ne.s32.totalorder %s72, %s73
      %p82 = scmp.eq.s32.totalorder %s20, 0
      %p83 = por %p81, %p82
      %p84 = scmp.ne.s32.totalorder %s72, %s73
      %p85 = scmp.eq.s32.totalorder %s21, 3
      %p86 = por %p84, %p85
      %p88 = scmp.ne.s32.totalorder %s73, %s87
      %p89 = scmp.eq.s32.totalorder %s21, 0
      %p90 = por %p88, %p89
      %s92 = sadd.s32 %s91, 1
      %p95 = scmp.eq.s32.totalorder %s15, 3
      %p96 = scmp.ne.s32.totalorder %s91, %s93
      %p97 = scmp.eq.s32.totalorder %s15, 0
      %p98 = por %p96, %p97
      %p99 = scmp.ne.s32.totalorder %s91, %s93
      %p100 = scmp.eq.s32.totalorder %s20, 3
      %p101 = por %p99, %p100
      %p102 = scmp.ne.s32.totalorder %s93, %s94
      %p103 = scmp.eq.s32.totalorder %s20, 0
      %p104 = por %p102, %p103
      %p105 = scmp.ne.s32.totalorder %s93, %s94
      %p106 = scmp.eq.s32.totalorder %s21, 3
      %p107 = por %p105, %p106
      %p109 = scmp.ne.s32.totalorder %s94, %s108
      %p110 = scmp.eq.s32.totalorder %s21, 0
      %p111 = por %p109, %p110
      %s113 = sadd.s32 %s112, 1
      %p116 = scmp.eq.s32.totalorder %s15, 3
      %p117 = scmp.ne.s32.totalorder %s112, %s114
      %p118 = scmp.eq.s32.totalorder %s15, 0
      %p119 = por %p117, %p118
      %p120 = scmp.ne.s32.totalorder %s112, %s114
      %p121 = scmp.eq.s32.totalorder %s20, 3
      %p122 = por %p120, %p121
      %p123 = scmp.ne.s32.totalorder %s114, %s115
      %p124 = scmp.eq.s32.totalorder %s20, 0
      %p125 = por %p123, %p124
      %p126 = scmp.ne.s32.totalorder %s114, %s115
      %p127 = scmp.eq.s32.totalorder %s21, 3
      %p128 = por %p126, %p127
      %p130 = scmp.ne.s32.totalorder %s115, %s129
      %p131 = scmp.eq.s32.totalorder %s21, 0
      %p132 = por %p130, %p131
      %p133 = scmp.le.s32.totalorder 1, %s15
      %p134 = scmp.lt.s32.totalorder %s15, 5
      %p135 = pnand %p133, %p134
      %p136 = pneg %p135
      // Predicated region
      $region9: #{tpu_custom_call.1} parent=5 // pred_check
        _
      $region10: #{tpu_custom_call.1} parent=5 // pred_check_branch
        %138 = sbr.rel (%p135) target = $region12
      $region11: #{tpu_custom_call.1} parent=5 // pred_region
        %s139 = ssub.s32 %s15, 1
        // Predicated region
        $region13: #{tpu_custom_call.1} parent=11 // pred_check
          %p140 = pneg %p62
        $region14: #{tpu_custom_call.1} parent=11 // pred_check_branch
          %142 = sbr.rel (%p140) target = $region16
        $region15: #{tpu_custom_call.1} parent=11 // pred_region
          %s144 = ssub.s32 256, 256
          %145 = vsyncadd [#allocation7], %s144
          %s147 = sshll.u32 [#allocation6], 4
          %s148 = int_to_ptr.vmem [resolvable:$true] %s147
          %150 = dma.hbm_to_vmem [thread:$0]  %s1, 256, %s148, [#allocation7]
        $region16: #{tpu_custom_call.1} parent=11 // pred_fallthru
          _
        // Predicated region
        $region17: #{tpu_custom_call.1} parent=11 // pred_check
          %p151 = pneg %p83
        $region18: #{tpu_custom_call.1} parent=11 // pred_check_branch
          %153 = sbr.rel (%p151) target = $region20
        $region19: #{tpu_custom_call.1} parent=11 // pred_region
          %s155 = ssub.s32 64, 64
          %156 = vsyncadd [#allocation7], %s155
          %s158 = sshll.u32 [#allocation8], 4
          %s159 = int_to_ptr.vmem [resolvable:$true] %s158
          %161 = dma.hbm_to_vmem [thread:$0]  %s2, 64, %s159, [#allocation7]
        $region20: #{tpu_custom_call.1} parent=11 // pred_fallthru
          _
        // Predicated region
        $region21: #{tpu_custom_call.1} parent=11 // pred_check
          %p162 = pneg %p104
        $region22: #{tpu_custom_call.1} parent=11 // pred_check_branch
          %164 = sbr.rel (%p162) target = $region24
        $region23: #{tpu_custom_call.1} parent=11 // pred_region
          _
        $region24: #{tpu_custom_call.1} parent=11 // pred_fallthru
          _
      $region12: #{tpu_custom_call.1} parent=5 // pred_fallthru
        _
      %p165 = scmp.lt.s32.totalorder %s15, 4
      // Predicated region
      $region25: #{tpu_custom_call.1} parent=5 // pred_check
        %p166 = pneg %p165
      $region26: #{tpu_custom_call.1} parent=5 // pred_check_branch
        %168 = sbr.rel (%p166) target = $region28
      $region27: #{tpu_custom_call.1} parent=5 // pred_region
        // Predicated region
        $region29: #{tpu_custom_call.1} parent=27 // pred_check
          %p169 = pneg %p35
        $region30: #{tpu_custom_call.1} parent=27 // pred_check_branch
          %171 = sbr.rel (%p169) target = $region32
        $region31: #{tpu_custom_call.1} parent=27 // pred_region
          %s172 = sand.u32 %s25, 1
          %s173 = scalar_lea.sflag [#allocation4], %s172
          %s174 = sand.u32 %s25, 1
          %s175 = smul.addr %s174, 256
          %s176 = scalar_lea.vmem [#allocation3], %s175
          %s177 = smul.u32 16, %s15
          %s179 = ssub.s32 4096, 4096
          %180 = vsyncadd %s173, %s179
          %s181 = smul.addr %s177, 2
          %s182 = smul.addr %s181, 128
          %s183 = scalar_lea.hbm %s0, %s182
          %s184 = sshll.u32 %s176, 4
          %s185 = int_to_ptr.vmem [resolvable:$true] %s184
          %190 = dma.hbm_to_vmem [thread:$0]  %s183, 4096, %s185, %s173, 256, 256, 16
        $region32: #{tpu_custom_call.1} parent=27 // pred_fallthru
          _
      $region28: #{tpu_custom_call.1} parent=5 // pred_fallthru
        _
      %p191 = scmp.le.s32.totalorder 1, %s15
      %p192 = scmp.lt.s32.totalorder %s15, 5
      %p193 = pnand %p191, %p192
      %p194 = pneg %p193
      // Predicated region
      $region33: #{tpu_custom_call.1} parent=5 // pred_check
        _
      $region34: #{tpu_custom_call.1} parent=5 // pred_check_branch
        %196 = sbr.rel (%p193) target = $region36
      $region35: #{tpu_custom_call.1} parent=5 // pred_region
        %s197 = ssub.s32 %s15, 1
        %s198 = sand.u32 %s28, 1
        %s199 = scalar_lea.sflag [#allocation4], %s198
        %s200 = sand.u32 %s28, 1
        %s201 = smul.addr %s200, 256
        %s202 = scalar_lea.vmem [#allocation3], %s201
        // Predicated region
        $region37: #{tpu_custom_call.1} parent=35 // pred_check
          %p203 = pneg %p41
        $region38: #{tpu_custom_call.1} parent=35 // pred_check_branch
          %205 = sbr.rel (%p203) target = $region40
        $region39: #{tpu_custom_call.1} parent=35 // pred_region
          %206 = dma.done %s199, 4096
        $region40: #{tpu_custom_call.1} parent=35 // pred_fallthru
          _
        // Predicated region
        $region41: #{tpu_custom_call.1} parent=35 // pred_check
          %p207 = pneg %p62
        $region42: #{tpu_custom_call.1} parent=35 // pred_check_branch
          %209 = sbr.rel (%p207) target = $region44
        $region43: #{tpu_custom_call.1} parent=35 // pred_region
          %210 = dma.done [#allocation7], 256
        $region44: #{tpu_custom_call.1} parent=35 // pred_fallthru
          _
        // Predicated region
        $region45: #{tpu_custom_call.1} parent=35 // pred_check
          %p211 = pneg %p83
        $region46: #{tpu_custom_call.1} parent=35 // pred_check_branch
          %213 = sbr.rel (%p211) target = $region48
        $region47: #{tpu_custom_call.1} parent=35 // pred_region
          %214 = dma.done [#allocation7], 64
        $region48: #{tpu_custom_call.1} parent=35 // pred_fallthru
          _
        %s215 = sand.u32 %s28, 1
        %s216 = scalar_lea.sflag [#allocation4], %s215
        %s217 = sand.u32 %s28, 1
        %s218 = smul.addr %s217, 256
        %s219 = scalar_lea.vmem [#allocation3], %s218
        %p220 = pneg %p41
        %p221 = pneg %p38
        %p222 = pneg %p62
        %p223 = pneg %p59
        %p224 = pneg %p83
        %p225 = pneg %p80
        %p226 = pneg %p104
        %p227 = pneg %p101
        %p228 = pneg %p125
        %p229 = pneg %p122
        %s230 = smul.u32 16, %s20
        %p231 = scmp.eq.s32.totalorder %s20, 0
        // Predicated region
        $region49: #{tpu_custom_call.1} parent=35 // pred_check
          %p232 = pneg %p231
        $region50: #{tpu_custom_call.1} parent=35 // pred_check_branch
          %234 = sbr.rel (%p232) target = $region52
        $region51: #{tpu_custom_call.1} parent=35 // pred_region
          %vm235 = vcmask 0
          %236 = vst.msk [vmem:[#allocation9] sm:$0x1] %vm235, 0.0
        $region52: #{tpu_custom_call.1} parent=35 // pred_fallthru
          _
        %v237 = vld [vmem:[%s202] sm:$0xff]
        %v238 = vld [vmem:[%s202 + $0x8] sm:$0xff]
        %v239 = vld [vmem:[%s202 + $0x10] sm:$0xff]
        %v240 = vld [vmem:[%s202 + $0x18] sm:$0xff]
        %v241 = vld [vmem:[%s202 + $0x20] sm:$0xff]
        %v242 = vld [vmem:[%s202 + $0x28] sm:$0xff]
        %v243 = vld [vmem:[%s202 + $0x30] sm:$0xff]
        %v244 = vld [vmem:[%s202 + $0x38] sm:$0xff]
        %v245 = vld [vmem:[%s202 + $0x40] sm:$0xff]
        %v246 = vld [vmem:[%s202 + $0x48] sm:$0xff]
        %v247 = vld [vmem:[%s202 + $0x50] sm:$0xff]
        %v248 = vld [vmem:[%s202 + $0x58] sm:$0xff]
        %v249 = vld [vmem:[%s202 + $0x60] sm:$0xff]
        %v250 = vld [vmem:[%s202 + $0x68] sm:$0xff]
        %v251 = vld [vmem:[%s202 + $0x70] sm:$0xff]
        %v252 = vld [vmem:[%s202 + $0x78] sm:$0xff]
        %v253 = vld [vmem:[%s202 + $0x80] sm:$0xff]
        %v254 = vld [vmem:[%s202 + $0x88] sm:$0xff]
        %v255 = vld [vmem:[%s202 + $0x90] sm:$0xff]
        %v256 = vld [vmem:[%s202 + $0x98] sm:$0xff]
        %v257 = vld [vmem:[%s202 + $0xa0] sm:$0xff]
        %v258 = vld [vmem:[%s202 + $0xa8] sm:$0xff]
        %v259 = vld [vmem:[%s202 + $0xb0] sm:$0xff]
        %v260 = vld [vmem:[%s202 + $0xb8] sm:$0xff]
        %v261 = vld [vmem:[%s202 + $0xc0] sm:$0xff]
        %v262 = vld [vmem:[%s202 + $0xc8] sm:$0xff]
        %v263 = vld [vmem:[%s202 + $0xd0] sm:$0xff]
        %v264 = vld [vmem:[%s202 + $0xd8] sm:$0xff]
        %v265 = vld [vmem:[%s202 + $0xe0] sm:$0xff]
        %v266 = vld [vmem:[%s202 + $0xe8] sm:$0xff]
        %v267 = vld [vmem:[%s202 + $0xf0] sm:$0xff]
        %v268 = vld [vmem:[%s202 + $0xf8] sm:$0xff]
        %v269 = vmul.f32 %v237, %v237
        %v270 = vmul.f32 %v238, %v238
        %v271 = vmul.f32 %v239, %v239
        %v272 = vmul.f32 %v240, %v240
        %v273 = vmul.f32 %v241, %v241
        %v274 = vmul.f32 %v242, %v242
        %v275 = vmul.f32 %v243, %v243
        %v276 = vmul.f32 %v244, %v244
        %v277 = vmul.f32 %v245, %v245
        %v278 = vmul.f32 %v246, %v246
        %v279 = vmul.f32 %v247, %v247
        %v280 = vmul.f32 %v248, %v248
        %v281 = vmul.f32 %v249, %v249
        %v282 = vmul.f32 %v250, %v250
        %v283 = vmul.f32 %v251, %v251
        %v284 = vmul.f32 %v252, %v252
        %v285 = vmul.f32 %v253, %v253
        %v286 = vmul.f32 %v254, %v254
        %v287 = vmul.f32 %v255, %v255
        %v288 = vmul.f32 %v256, %v256
        %v289 = vmul.f32 %v257, %v257
        %v290 = vmul.f32 %v258, %v258
        %v291 = vmul.f32 %v259, %v259
        %v292 = vmul.f32 %v260, %v260
        %v293 = vmul.f32 %v261, %v261
        %v294 = vmul.f32 %v262, %v262
        %v295 = vmul.f32 %v263, %v263
        %v296 = vmul.f32 %v264, %v264
        %v297 = vmul.f32 %v265, %v265
        %v298 = vmul.f32 %v266, %v266
        %v299 = vmul.f32 %v267, %v267
        %v300 = vmul.f32 %v268, %v268
        %v301 = vld [vmem:[#allocation6] sm:$0xff]
        %v302 = vld [vmem:[#allocation6 + $0x8] sm:$0xff]
        %v303 = vand.u32 %v300, 4294901760
        %304 = vmatprep.subr.mxu0 %v303
        %v305 = vand.u32 %v299, 4294901760
        %306 = vmatpush1.xpose.msra.mxu0 %v305
        %v307 = vand.u32 %v298, 4294901760
        %308 = vmatprep.subr.mxu0 %v307
        %v309 = vand.u32 %v297, 4294901760
        %310 = vmatpush1.xpose.msra.mxu0 %v309
        %v311 = vand.u32 %v296, 4294901760
        %312 = vmatprep.subr.mxu0 %v311
        %v313 = vand.u32 %v295, 4294901760
        %314 = vmatpush1.xpose.msra.mxu0 %v313
        %v315 = vand.u32 %v294, 4294901760
        %316 = vmatprep.subr.mxu0 %v315
        %v317 = vand.u32 %v293, 4294901760
        %318 = vmatpush1.xpose.msra.mxu0 %v317
        %v319 = vand.u32 %v292, 4294901760
        %320 = vmatprep.subr.mxu0 %v319
        %v321 = vand.u32 %v291, 4294901760
        %322 = vmatpush1.xpose.msra.mxu0 %v321
        %v323 = vand.u32 %v290, 4294901760
        %324 = vmatprep.subr.mxu0 %v323
        %v325 = vand.u32 %v289, 4294901760
        %326 = vmatpush1.xpose.msra.mxu0 %v325
        %v327 = vand.u32 %v288, 4294901760
        %328 = vmatprep.subr.mxu0 %v327
        %v329 = vand.u32 %v287, 4294901760
        %330 = vmatpush1.xpose.msra.mxu0 %v329
        %v331 = vand.u32 %v286, 4294901760
        %332 = vmatprep.subr.mxu0 %v331
        %v333 = vand.u32 %v285, 4294901760
        %334 = vmatpush1.xpose.msra.mxu0 %v333
        %v335 = vand.u32 %v284, 4294901760
        %336 = vmatprep.subr.mxu0 %v335
        %v337 = vand.u32 %v283, 4294901760
        %338 = vmatpush1.xpose.msra.mxu0 %v337
        %v339 = vand.u32 %v282, 4294901760
        %340 = vmatprep.subr.mxu0 %v339
        %v341 = vand.u32 %v281, 4294901760
        %342 = vmatpush1.xpose.msra.mxu0 %v341
        %v343 = vand.u32 %v280, 4294901760
        %344 = vmatprep.subr.mxu0 %v343
        %v345 = vand.u32 %v279, 4294901760
        %346 = vmatpush1.xpose.msra.mxu0 %v345
        %v347 = vand.u32 %v278, 4294901760
        %348 = vmatprep.subr.mxu0 %v347
        %v349 = vand.u32 %v277, 4294901760
        %350 = vmatpush1.xpose.msra.mxu0 %v349
        %v351 = vand.u32 %v276, 4294901760
        %352 = vmatprep.subr.mxu0 %v351
        %v353 = vand.u32 %v275, 4294901760
        %354 = vmatpush1.xpose.msra.mxu0 %v353
        %v355 = vand.u32 %v274, 4294901760
        %356 = vmatprep.subr.mxu0 %v355
        %v357 = vand.u32 %v273, 4294901760
        %358 = vmatpush1.xpose.msra.mxu0 %v357
        %v359 = vand.u32 %v272, 4294901760
        %360 = vmatprep.subr.mxu0 %v359
        %v361 = vand.u32 %v271, 4294901760
        %362 = vmatpush1.xpose.msra.mxu0 %v361
        %v363 = vand.u32 %v270, 4294901760
        %364 = vmatprep.subr.mxu0 %v363
        %v365 = vand.u32 %v269, 4294901760
        %366 = vmatpush1.xpose.msra.mxu0 %v365
        %367 = vmatprep.subr.mxu0 0.0
        %368 = vmatpush2.xpose.msra.mxu0 0.0
        %369 = vmatprep.subr.mxu0 0.0
        %370 = vmatpush2.xpose.msra.mxu0 0.0
        %371 = vmatprep.subr.mxu0 0.0
        %372 = vmatpush2.xpose.msra.mxu0 0.0
        %373 = vmatprep.subr.mxu0 0.0
        %374 = vmatpush2.xpose.msra.mxu0 0.0
        %375 = vmatprep.subr.mxu0 0.0
        %376 = vmatpush2.xpose.msra.mxu0 0.0
        %377 = vmatprep.subr.mxu0 0.0
        %378 = vmatpush2.xpose.msra.mxu0 0.0
        %379 = vmatprep.subr.mxu0 0.0
        %380 = vmatpush2.xpose.msra.mxu0 0.0
        %381 = vmatprep.subr.mxu0 0.0
        %382 = vmatpush2.xpose.msra.mxu0 0.0
        %383 = vmatprep.subr.mxu0 0.0
        %384 = vmatpush2.xpose.msra.mxu0 0.0
        %385 = vmatprep.subr.mxu0 0.0
        %386 = vmatpush2.xpose.msra.mxu0 0.0
        %387 = vmatprep.subr.mxu0 0.0
        %388 = vmatpush2.xpose.msra.mxu0 0.0
        %389 = vmatprep.subr.mxu0 0.0
        %390 = vmatpush2.xpose.msra.mxu0 0.0
        %391 = vmatprep.subr.mxu0 0.0
        %392 = vmatpush2.xpose.msra.mxu0 0.0
        %393 = vmatprep.subr.mxu0 0.0
        %394 = vmatpush2.xpose.msra.mxu0 0.0
        %395 = vmatprep.subr.mxu0 0.0
        %396 = vmatpush2.xpose.msra.mxu0 0.0
        %397 = vmatprep.subr.mxu0 0.0
        %398 = vmatpush2.xpose.msra.mxu0 0.0
        %v399 = vand.u32 %v302, 4294901760
        %v400 = vsub.f32 %v302, %v399
        %v401 = vand.u32 %v400, 4294901760
        %v402 = vsub.f32 %v400, %v401
        %v403 = vand.u32 %v402, 4294901760
        %404 = vmatprep.mubr.f32.mxu0 %v403
        %v405 = vand.u32 %v301, 4294901760
        %v406 = vsub.f32 %v301, %v405
        %v407 = vand.u32 %v406, 4294901760
        %v408 = vsub.f32 %v406, %v407
        %v409 = vand.u32 %v408, 4294901760
        %410 = vmatmul.mubr.f32.gmra.mxu0 %v409
        %v411 = vpop.f32.mrf.mxu0
        %v412 = vadd.f32 0.0, %v411
        %v413 = vpop.f32.mrf.mxu0
        %414 = vdwg.mxu0
        %v415 = vand.u32 %v300, 4294901760
        %v416 = vsub.f32 %v300, %v415
        %v417 = vand.u32 %v416, 4294901760
        %v418 = vsub.f32 %v416, %v417
        %v419 = vand.u32 %v418, 4294901760
        %420 = vmatprep.subr.mxu0 %v419
        %v421 = vand.u32 %v299, 4294901760
        %v422 = vsub.f32 %v299, %v421
        %v423 = vand.u32 %v422, 4294901760
        %v424 = vsub.f32 %v422, %v423
        %v425 = vand.u32 %v424, 4294901760
        %426 = vmatpush1.xpose.msra.mxu0 %v425
        %v427 = vand.u32 %v298, 4294901760
        %v428 = vsub.f32 %v298, %v427
        %v429 = vand.u32 %v428, 4294901760
        %v430 = vsub.f32 %v428, %v429
        %v431 = vand.u32 %v430, 4294901760
        %432 = vmatprep.subr.mxu0 %v431
        %v433 = vand.u32 %v297, 4294901760
        %v434 = vsub.f32 %v297, %v433
        %v435 = vand.u32 %v434, 4294901760
        %v436 = vsub.f32 %v434, %v435
        %v437 = vand.u32 %v436, 4294901760
        %438 = vmatpush1.xpose.msra.mxu0 %v437
        %v439 = vand.u32 %v296, 4294901760
        %v440 = vsub.f32 %v296, %v439
        %v441 = vand.u32 %v440, 4294901760
        %v442 = vsub.f32 %v440, %v441
        %v443 = vand.u32 %v442, 4294901760
        %444 = vmatprep.subr.mxu0 %v443
        %v445 = vand.u32 %v295, 4294901760
        %v446 = vsub.f32 %v295, %v445
        %v447 = vand.u32 %v446, 4294901760
        %v448 = vsub.f32 %v446, %v447
        %v449 = vand.u32 %v448, 4294901760
        %450 = vmatpush1.xpose.msra.mxu0 %v449
        %v451 = vand.u32 %v294, 4294901760
        %v452 = vsub.f32 %v294, %v451
        %v453 = vand.u32 %v452, 4294901760
        %v454 = vsub.f32 %v452, %v453
        %v455 = vand.u32 %v454, 4294901760
        %456 = vmatprep.subr.mxu0 %v455
        %v457 = vand.u32 %v293, 4294901760
        %v458 = vsub.f32 %v293, %v457
        %v459 = vand.u32 %v458, 4294901760
        %v460 = vsub.f32 %v458, %v459
        %v461 = vand.u32 %v460, 4294901760
        %462 = vmatpush1.xpose.msra.mxu0 %v461
        %v463 = vand.u32 %v292, 4294901760
        %v464 = vsub.f32 %v292, %v463
        %v465 = vand.u32 %v464, 4294901760
        %v466 = vsub.f32 %v464, %v465
        %v467 = vand.u32 %v466, 4294901760
        %468 = vmatprep.subr.mxu0 %v467
        %v469 = vand.u32 %v291, 4294901760
        %v470 = vsub.f32 %v291, %v469
        %v471 = vand.u32 %v470, 4294901760
        %v472 = vsub.f32 %v470, %v471
        %v473 = vand.u32 %v472, 4294901760
        %474 = vmatpush1.xpose.msra.mxu0 %v473
        %v475 = vand.u32 %v290, 4294901760
        %v476 = vsub.f32 %v290, %v475
        %v477 = vand.u32 %v476, 4294901760
        %v478 = vsub.f32 %v476, %v477
        %v479 = vand.u32 %v478, 4294901760
        %480 = vmatprep.subr.mxu0 %v479
        %v481 = vand.u32 %v289, 4294901760
        %v482 = vsub.f32 %v289, %v481
        %v483 = vand.u32 %v482, 4294901760
        %v484 = vsub.f32 %v482, %v483
        %v485 = vand.u32 %v484, 4294901760
        %486 = vmatpush1.xpose.msra.mxu0 %v485
        %v487 = vand.u32 %v288, 4294901760
        %v488 = vsub.f32 %v288, %v487
        %v489 = vand.u32 %v488, 4294901760
        %v490 = vsub.f32 %v488, %v489
        %v491 = vand.u32 %v490, 4294901760
        %492 = vmatprep.subr.mxu0 %v491
        %v493 = vand.u32 %v287, 4294901760
        %v494 = vsub.f32 %v287, %v493
        %v495 = vand.u32 %v494, 4294901760
        %v496 = vsub.f32 %v494, %v495
        %v497 = vand.u32 %v496, 4294901760
        %498 = vmatpush1.xpose.msra.mxu0 %v497
        %v499 = vand.u32 %v286, 4294901760
        %v500 = vsub.f32 %v286, %v499
        %v501 = vand.u32 %v500, 4294901760
        %v502 = vsub.f32 %v500, %v501
        %v503 = vand.u32 %v502, 4294901760
        %504 = vmatprep.subr.mxu0 %v503
        %v505 = vand.u32 %v285, 4294901760
        %v506 = vsub.f32 %v285, %v505
        %v507 = vand.u32 %v506, 4294901760
        %v508 = vsub.f32 %v506, %v507
        %v509 = vand.u32 %v508, 4294901760
        %510 = vmatpush1.xpose.msra.mxu0 %v509
        %v511 = vand.u32 %v284, 4294901760
        %v512 = vsub.f32 %v284, %v511
        %v513 = vand.u32 %v512, 4294901760
        %v514 = vsub.f32 %v512, %v513
        %v515 = vand.u32 %v514, 4294901760
        %516 = vmatprep.subr.mxu0 %v515
        %v517 = vand.u32 %v283, 4294901760
        %v518 = vsub.f32 %v283, %v517
        %v519 = vand.u32 %v518, 4294901760
        %v520 = vsub.f32 %v518, %v519
        %v521 = vand.u32 %v520, 4294901760
        %522 = vmatpush1.xpose.msra.mxu0 %v521
        %v523 = vand.u32 %v282, 4294901760
        %v524 = vsub.f32 %v282, %v523
        %v525 = vand.u32 %v524, 4294901760
        %v526 = vsub.f32 %v524, %v525
        %v527 = vand.u32 %v526, 4294901760
        %528 = vmatprep.subr.mxu0 %v527
        %v529 = vand.u32 %v281, 4294901760
        %v530 = vsub.f32 %v281, %v529
        %v531 = vand.u32 %v530, 4294901760
        %v532 = vsub.f32 %v530, %v531
        %v533 = vand.u32 %v532, 4294901760
        %534 = vmatpush1.xpose.msra.mxu0 %v533
        %v535 = vand.u32 %v280, 4294901760
        %v536 = vsub.f32 %v280, %v535
        %v537 = vand.u32 %v536, 4294901760
        %v538 = vsub.f32 %v536, %v537
        %v539 = vand.u32 %v538, 4294901760
        %540 = vmatprep.subr.mxu0 %v539
        %v541 = vand.u32 %v279, 4294901760
        %v542 = vsub.f32 %v279, %v541
        %v543 = vand.u32 %v542, 4294901760
        %v544 = vsub.f32 %v542, %v543
        %v545 = vand.u32 %v544, 4294901760
        %546 = vmatpush1.xpose.msra.mxu0 %v545
        %v547 = vand.u32 %v278, 4294901760
        %v548 = vsub.f32 %v278, %v547
        %v549 = vand.u32 %v548, 4294901760
        %v550 = vsub.f32 %v548, %v549
        %v551 = vand.u32 %v550, 4294901760
        %552 = vmatprep.subr.mxu0 %v551
        %v553 = vand.u32 %v277, 4294901760
        %v554 = vsub.f32 %v277, %v553
        %v555 = vand.u32 %v554, 4294901760
        %v556 = vsub.f32 %v554, %v555
        %v557 = vand.u32 %v556, 4294901760
        %558 = vmatpush1.xpose.msra.mxu0 %v557
        %v559 = vand.u32 %v276, 4294901760
        %v560 = vsub.f32 %v276, %v559
        %v561 = vand.u32 %v560, 4294901760
        %v562 = vsub.f32 %v560, %v561
        %v563 = vand.u32 %v562, 4294901760
        %564 = vmatprep.subr.mxu0 %v563
        %v565 = vand.u32 %v275, 4294901760
        %v566 = vsub.f32 %v275, %v565
        %v567 = vand.u32 %v566, 4294901760
        %v568 = vsub.f32 %v566, %v567
        %v569 = vand.u32 %v568, 4294901760
        %570 = vmatpush1.xpose.msra.mxu0 %v569
        %v571 = vand.u32 %v274, 4294901760
        %v572 = vsub.f32 %v274, %v571
        %v573 = vand.u32 %v572, 4294901760
        %v574 = vsub.f32 %v572, %v573
        %v575 = vand.u32 %v574, 4294901760
        %576 = vmatprep.subr.mxu0 %v575
        %v577 = vand.u32 %v273, 4294901760
        %v578 = vsub.f32 %v273, %v577
        %v579 = vand.u32 %v578, 4294901760
        %v580 = vsub.f32 %v578, %v579
        %v581 = vand.u32 %v580, 4294901760
        %582 = vmatpush1.xpose.msra.mxu0 %v581
        %v583 = vand.u32 %v272, 4294901760
        %v584 = vsub.f32 %v272, %v583
        %v585 = vand.u32 %v584, 4294901760
        %v586 = vsub.f32 %v584, %v585
        %v587 = vand.u32 %v586, 4294901760
        %588 = vmatprep.subr.mxu0 %v587
        %v589 = vand.u32 %v271, 4294901760
        %v590 = vsub.f32 %v271, %v589
        %v591 = vand.u32 %v590, 4294901760
        %v592 = vsub.f32 %v590, %v591
        %v593 = vand.u32 %v592, 4294901760
        %594 = vmatpush1.xpose.msra.mxu0 %v593
        %v595 = vand.u32 %v270, 4294901760
        %v596 = vsub.f32 %v270, %v595
        %v597 = vand.u32 %v596, 4294901760
        %v598 = vsub.f32 %v596, %v597
        %v599 = vand.u32 %v598, 4294901760
        %600 = vmatprep.subr.mxu0 %v599
        %v601 = vand.u32 %v269, 4294901760
        %v602 = vsub.f32 %v269, %v601
        %v603 = vand.u32 %v602, 4294901760
        %v604 = vsub.f32 %v602, %v603
        %v605 = vand.u32 %v604, 4294901760
        %606 = vmatpush1.xpose.msra.mxu0 %v605
        %607 = vmatprep.subr.mxu0 0.0
        %608 = vmatpush2.xpose.msra.mxu0 0.0
        %609 = vmatprep.subr.mxu0 0.0
        %610 = vmatpush2.xpose.msra.mxu0 0.0
        %611 = vmatprep.subr.mxu0 0.0
        %612 = vmatpush2.xpose.msra.mxu0 0.0
        %613 = vmatprep.subr.mxu0 0.0
        %614 = vmatpush2.xpose.msra.mxu0 0.0
        %615 = vmatprep.subr.mxu0 0.0
        %616 = vmatpush2.xpose.msra.mxu0 0.0
        %617 = vmatprep.subr.mxu0 0.0
        %618 = vmatpush2.xpose.msra.mxu0 0.0
        %619 = vmatprep.subr.mxu0 0.0
        %620 = vmatpush2.xpose.msra.mxu0 0.0
        %621 = vmatprep.subr.mxu0 0.0
        %622 = vmatpush2.xpose.msra.mxu0 0.0
        %623 = vmatprep.subr.mxu0 0.0
        %624 = vmatpush2.xpose.msra.mxu0 0.0
        %625 = vmatprep.subr.mxu0 0.0
        %626 = vmatpush2.xpose.msra.mxu0 0.0
        %627 = vmatprep.subr.mxu0 0.0
        %628 = vmatpush2.xpose.msra.mxu0 0.0
        %629 = vmatprep.subr.mxu0 0.0
        %630 = vmatpush2.xpose.msra.mxu0 0.0
        %631 = vmatprep.subr.mxu0 0.0
        %632 = vmatpush2.xpose.msra.mxu0 0.0
        %633 = vmatprep.subr.mxu0 0.0
        %634 = vmatpush2.xpose.msra.mxu0 0.0
        %635 = vmatprep.subr.mxu0 0.0
        %636 = vmatpush2.xpose.msra.mxu0 0.0
        %637 = vmatprep.subr.mxu0 0.0
        %638 = vmatpush2.xpose.msra.mxu0 0.0
        %v639 = vand.u32 %v302, 4294901760
        %640 = vmatprep.mubr.f32.mxu0 %v639
        %v641 = vand.u32 %v301, 4294901760
        %642 = vmatmul.mubr.f32.gmra.mxu0 %v641
        %v643 = vpop.f32.mrf.mxu0
        %v644 = vadd.f32 %v412, %v643
        %v645 = vpop.f32.mrf.mxu0
        %646 = vdwg.mxu0
        %v647 = vand.u32 %v300, 4294901760
        %v648 = vsub.f32 %v300, %v647
        %649 = vmatprep.subr.mxu0 %v648
        %v650 = vand.u32 %v299, 4294901760
        %v651 = vsub.f32 %v299, %v650
        %652 = vmatpush1.xpose.msra.mxu0 %v651
        %v653 = vand.u32 %v298, 4294901760
        %v654 = vsub.f32 %v298, %v653
        %655 = vmatprep.subr.mxu0 %v654
        %v656 = vand.u32 %v297, 4294901760
        %v657 = vsub.f32 %v297, %v656
        %658 = vmatpush1.xpose.msra.mxu0 %v657
        %v659 = vand.u32 %v296, 4294901760
        %v660 = vsub.f32 %v296, %v659
        %661 = vmatprep.subr.mxu0 %v660
        %v662 = vand.u32 %v295, 4294901760
        %v663 = vsub.f32 %v295, %v662
        %664 = vmatpush1.xpose.msra.mxu0 %v663
        %v665 = vand.u32 %v294, 4294901760
        %v666 = vsub.f32 %v294, %v665
        %667 = vmatprep.subr.mxu0 %v666
        %v668 = vand.u32 %v293, 4294901760
        %v669 = vsub.f32 %v293, %v668
        %670 = vmatpush1.xpose.msra.mxu0 %v669
        %v671 = vand.u32 %v292, 4294901760
        %v672 = vsub.f32 %v292, %v671
        %673 = vmatprep.subr.mxu0 %v672
        %v674 = vand.u32 %v291, 4294901760
        %v675 = vsub.f32 %v291, %v674
        %676 = vmatpush1.xpose.msra.mxu0 %v675
        %v677 = vand.u32 %v290, 4294901760
        %v678 = vsub.f32 %v290, %v677
        %679 = vmatprep.subr.mxu0 %v678
        %v680 = vand.u32 %v289, 4294901760
        %v681 = vsub.f32 %v289, %v680
        %682 = vmatpush1.xpose.msra.mxu0 %v681
        %v683 = vand.u32 %v288, 4294901760
        %v684 = vsub.f32 %v288, %v683
        %685 = vmatprep.subr.mxu0 %v684
        %v686 = vand.u32 %v287, 4294901760
        %v687 = vsub.f32 %v287, %v686
        %688 = vmatpush1.xpose.msra.mxu0 %v687
        %v689 = vand.u32 %v286, 4294901760
        %v690 = vsub.f32 %v286, %v689
        %691 = vmatprep.subr.mxu0 %v690
        %v692 = vand.u32 %v285, 4294901760
        %v693 = vsub.f32 %v285, %v692
        %694 = vmatpush1.xpose.msra.mxu0 %v693
        %v695 = vand.u32 %v284, 4294901760
        %v696 = vsub.f32 %v284, %v695
        %697 = vmatprep.subr.mxu0 %v696
        %v698 = vand.u32 %v283, 4294901760
        %v699 = vsub.f32 %v283, %v698
        %700 = vmatpush1.xpose.msra.mxu0 %v699
        %v701 = vand.u32 %v282, 4294901760
        %v702 = vsub.f32 %v282, %v701
        %703 = vmatprep.subr.mxu0 %v702
        %v704 = vand.u32 %v281, 4294901760
        %v705 = vsub.f32 %v281, %v704
        %706 = vmatpush1.xpose.msra.mxu0 %v705
        %v707 = vand.u32 %v280, 4294901760
        %v708 = vsub.f32 %v280, %v707
        %709 = vmatprep.subr.mxu0 %v708
        %v710 = vand.u32 %v279, 4294901760
        %v711 = vsub.f32 %v279, %v710
        %712 = vmatpush1.xpose.msra.mxu0 %v711
        %v713 = vand.u32 %v278, 4294901760
        %v714 = vsub.f32 %v278, %v713
        %715 = vmatprep.subr.mxu0 %v714
        %v716 = vand.u32 %v277, 4294901760
        %v717 = vsub.f32 %v277, %v716
        %718 = vmatpush1.xpose.msra.mxu0 %v717
        %v719 = vand.u32 %v276, 4294901760
        %v720 = vsub.f32 %v276, %v719
        %721 = vmatprep.subr.mxu0 %v720
        %v722 = vand.u32 %v275, 4294901760
        %v723 = vsub.f32 %v275, %v722
        %724 = vmatpush1.xpose.msra.mxu0 %v723
        %v725 = vand.u32 %v274, 4294901760
        %v726 = vsub.f32 %v274, %v725
        %727 = vmatprep.subr.mxu0 %v726
        %v728 = vand.u32 %v273, 4294901760
        %v729 = vsub.f32 %v273, %v728
        %730 = vmatpush1.xpose.msra.mxu0 %v729
        %v731 = vand.u32 %v272, 4294901760
        %v732 = vsub.f32 %v272, %v731
        %733 = vmatprep.subr.mxu0 %v732
        %v734 = vand.u32 %v271, 4294901760
        %v735 = vsub.f32 %v271, %v734
        %736 = vmatpush1.xpose.msra.mxu0 %v735
        %v737 = vand.u32 %v270, 4294901760
        %v738 = vsub.f32 %v270, %v737
        %739 = vmatprep.subr.mxu0 %v738
        %v740 = vand.u32 %v269, 4294901760
        %v741 = vsub.f32 %v269, %v740
        %742 = vmatpush1.xpose.msra.mxu0 %v741
        %743 = vmatprep.subr.mxu0 0.0
        %744 = vmatpush2.xpose.msra.mxu0 0.0
        %745 = vmatprep.subr.mxu0 0.0
        %746 = vmatpush2.xpose.msra.mxu0 0.0
        %747 = vmatprep.subr.mxu0 0.0
        %748 = vmatpush2.xpose.msra.mxu0 0.0
        %749 = vmatprep.subr.mxu0 0.0
        %750 = vmatpush2.xpose.msra.mxu0 0.0
        %751 = vmatprep.subr.mxu0 0.0
        %752 = vmatpush2.xpose.msra.mxu0 0.0
        %753 = vmatprep.subr.mxu0 0.0
        %754 = vmatpush2.xpose.msra.mxu0 0.0
        %755 = vmatprep.subr.mxu0 0.0
        %756 = vmatpush2.xpose.msra.mxu0 0.0
        %757 = vmatprep.subr.mxu0 0.0
        %758 = vmatpush2.xpose.msra.mxu0 0.0
        %759 = vmatprep.subr.mxu0 0.0
        %760 = vmatpush2.xpose.msra.mxu0 0.0
        %761 = vmatprep.subr.mxu0 0.0
        %762 = vmatpush2.xpose.msra.mxu0 0.0
        %763 = vmatprep.subr.mxu0 0.0
        %764 = vmatpush2.xpose.msra.mxu0 0.0
        %765 = vmatprep.subr.mxu0 0.0
        %766 = vmatpush2.xpose.msra.mxu0 0.0
        %767 = vmatprep.subr.mxu0 0.0
        %768 = vmatpush2.xpose.msra.mxu0 0.0
        %769 = vmatprep.subr.mxu0 0.0
        %770 = vmatpush2.xpose.msra.mxu0 0.0
        %771 = vmatprep.subr.mxu0 0.0
        %772 = vmatpush2.xpose.msra.mxu0 0.0
        %773 = vmatprep.subr.mxu0 0.0
        %774 = vmatpush2.xpose.msra.mxu0 0.0
        %v775 = vand.u32 %v302, 4294901760
        %v776 = vsub.f32 %v302, %v775
        %777 = vmatprep.mubr.f32.mxu0 %v776
        %v778 = vand.u32 %v301, 4294901760
        %v779 = vsub.f32 %v301, %v778
        %780 = vmatmul.mubr.f32.gmra.mxu0 %v779
        %v781 = vpop.f32.mrf.mxu0
        %v782 = vadd.f32 %v644, %v781
        %v783 = vpop.f32.mrf.mxu0
        %784 = vdwg.mxu0
        %v785 = vand.u32 %v300, 4294901760
        %786 = vmatprep.subr.mxu0 %v785
        %v787 = vand.u32 %v299, 4294901760
        %788 = vmatpush1.xpose.msra.mxu0 %v787
        %v789 = vand.u32 %v298, 4294901760
        %790 = vmatprep.subr.mxu0 %v789
        %v791 = vand.u32 %v297, 4294901760
        %792 = vmatpush1.xpose.msra.mxu0 %v791
        %v793 = vand.u32 %v296, 4294901760
        %794 = vmatprep.subr.mxu0 %v793
        %v795 = vand.u32 %v295, 4294901760
        %796 = vmatpush1.xpose.msra.mxu0 %v795
        %v797 = vand.u32 %v294, 4294901760
        %798 = vmatprep.subr.mxu0 %v797
        %v799 = vand.u32 %v293, 4294901760
        %800 = vmatpush1.xpose.msra.mxu0 %v799
        %v801 = vand.u32 %v292, 4294901760
        %802 = vmatprep.subr.mxu0 %v801
        %v803 = vand.u32 %v291, 4294901760
        %804 = vmatpush1.xpose.msra.mxu0 %v803
        %v805 = vand.u32 %v290, 4294901760
        %806 = vmatprep.subr.mxu0 %v805
        %v807 = vand.u32 %v289, 4294901760
        %808 = vmatpush1.xpose.msra.mxu0 %v807
        %v809 = vand.u32 %v288, 4294901760
        %810 = vmatprep.subr.mxu0 %v809
        %v811 = vand.u32 %v287, 4294901760
        %812 = vmatpush1.xpose.msra.mxu0 %v811
        %v813 = vand.u32 %v286, 4294901760
        %814 = vmatprep.subr.mxu0 %v813
        %v815 = vand.u32 %v285, 4294901760
        %816 = vmatpush1.xpose.msra.mxu0 %v815
        %v817 = vand.u32 %v284, 4294901760
        %818 = vmatprep.subr.mxu0 %v817
        %v819 = vand.u32 %v283, 4294901760
        %820 = vmatpush1.xpose.msra.mxu0 %v819
        %v821 = vand.u32 %v282, 4294901760
        %822 = vmatprep.subr.mxu0 %v821
        %v823 = vand.u32 %v281, 4294901760
        %824 = vmatpush1.xpose.msra.mxu0 %v823
        %v825 = vand.u32 %v280, 4294901760
        %826 = vmatprep.subr.mxu0 %v825
        %v827 = vand.u32 %v279, 4294901760
        %828 = vmatpush1.xpose.msra.mxu0 %v827
        %v829 = vand.u32 %v278, 4294901760
        %830 = vmatprep.subr.mxu0 %v829
        %v831 = vand.u32 %v277, 4294901760
        %832 = vmatpush1.xpose.msra.mxu0 %v831
        %v833 = vand.u32 %v276, 4294901760
        %834 = vmatprep.subr.mxu0 %v833
        %v835 = vand.u32 %v275, 4294901760
        %836 = vmatpush1.xpose.msra.mxu0 %v835
        %v837 = vand.u32 %v274, 4294901760
        %838 = vmatprep.subr.mxu0 %v837
        %v839 = vand.u32 %v273, 4294901760
        %840 = vmatpush1.xpose.msra.mxu0 %v839
        %v841 = vand.u32 %v272, 4294901760
        %842 = vmatprep.subr.mxu0 %v841
        %v843 = vand.u32 %v271, 4294901760
        %844 = vmatpush1.xpose.msra.mxu0 %v843
        %v845 = vand.u32 %v270, 4294901760
        %846 = vmatprep.subr.mxu0 %v845
        %v847 = vand.u32 %v269, 4294901760
        %848 = vmatpush1.xpose.msra.mxu0 %v847
        %849 = vmatprep.subr.mxu0 0.0
        %850 = vmatpush2.xpose.msra.mxu0 0.0
        %851 = vmatprep.subr.mxu0 0.0
        %852 = vmatpush2.xpose.msra.mxu0 0.0
        %853 = vmatprep.subr.mxu0 0.0
        %854 = vmatpush2.xpose.msra.mxu0 0.0
        %855 = vmatprep.subr.mxu0 0.0
        %856 = vmatpush2.xpose.msra.mxu0 0.0
        %857 = vmatprep.subr.mxu0 0.0
        %858 = vmatpush2.xpose.msra.mxu0 0.0
        %859 = vmatprep.subr.mxu0 0.0
        %860 = vmatpush2.xpose.msra.mxu0 0.0
        %861 = vmatprep.subr.mxu0 0.0
        %862 = vmatpush2.xpose.msra.mxu0 0.0
        %863 = vmatprep.subr.mxu0 0.0
        %864 = vmatpush2.xpose.msra.mxu0 0.0
        %865 = vmatprep.subr.mxu0 0.0
        %866 = vmatpush2.xpose.msra.mxu0 0.0
        %867 = vmatprep.subr.mxu0 0.0
        %868 = vmatpush2.xpose.msra.mxu0 0.0
        %869 = vmatprep.subr.mxu0 0.0
        %870 = vmatpush2.xpose.msra.mxu0 0.0
        %871 = vmatprep.subr.mxu0 0.0
        %872 = vmatpush2.xpose.msra.mxu0 0.0
        %873 = vmatprep.subr.mxu0 0.0
        %874 = vmatpush2.xpose.msra.mxu0 0.0
        %875 = vmatprep.subr.mxu0 0.0
        %876 = vmatpush2.xpose.msra.mxu0 0.0
        %877 = vmatprep.subr.mxu0 0.0
        %878 = vmatpush2.xpose.msra.mxu0 0.0
        %879 = vmatprep.subr.mxu0 0.0
        %880 = vmatpush2.xpose.msra.mxu0 0.0
        %v881 = vand.u32 %v302, 4294901760
        %v882 = vsub.f32 %v302, %v881
        %v883 = vand.u32 %v882, 4294901760
        %884 = vmatprep.mubr.f32.mxu0 %v883
        %v885 = vand.u32 %v301, 4294901760
        %v886 = vsub.f32 %v301, %v885
        %v887 = vand.u32 %v886, 4294901760
        %888 = vmatmul.mubr.f32.gmra.mxu0 %v887
        %v889 = vpop.f32.mrf.mxu0
        %v890 = vadd.f32 %v782, %v889
        %v891 = vpop.f32.mrf.mxu0
        %892 = vdwg.mxu0
        %v893 = vand.u32 %v300, 4294901760
        %v894 = vsub.f32 %v300, %v893
        %v895 = vand.u32 %v894, 4294901760
        %896 = vmatprep.subr.mxu0 %v895
        %v897 = vand.u32 %v299, 4294901760
        %v898 = vsub.f32 %v299, %v897
        %v899 = vand.u32 %v898, 4294901760
        %900 = vmatpush1.xpose.msra.mxu0 %v899
        %v901 = vand.u32 %v298, 4294901760
        %v902 = vsub.f32 %v298, %v901
        %v903 = vand.u32 %v902, 4294901760
        %904 = vmatprep.subr.mxu0 %v903
        %v905 = vand.u32 %v297, 4294901760
        %v906 = vsub.f32 %v297, %v905
        %v907 = vand.u32 %v906, 4294901760
        %908 = vmatpush1.xpose.msra.mxu0 %v907
        %v909 = vand.u32 %v296, 4294901760
        %v910 = vsub.f32 %v296, %v909
        %v911 = vand.u32 %v910, 4294901760
        %912 = vmatprep.subr.mxu0 %v911
        %v913 = vand.u32 %v295, 4294901760
        %v914 = vsub.f32 %v295, %v913
        %v915 = vand.u32 %v914, 4294901760
        %916 = vmatpush1.xpose.msra.mxu0 %v915
        %v917 = vand.u32 %v294, 4294901760
        %v918 = vsub.f32 %v294, %v917
        %v919 = vand.u32 %v918, 4294901760
        %920 = vmatprep.subr.mxu0 %v919
        %v921 = vand.u32 %v293, 4294901760
        %v922 = vsub.f32 %v293, %v921
        %v923 = vand.u32 %v922, 4294901760
        %924 = vmatpush1.xpose.msra.mxu0 %v923
        %v925 = vand.u32 %v292, 4294901760
        %v926 = vsub.f32 %v292, %v925
        %v927 = vand.u32 %v926, 4294901760
        %928 = vmatprep.subr.mxu0 %v927
        %v929 = vand.u32 %v291, 4294901760
        %v930 = vsub.f32 %v291, %v929
        %v931 = vand.u32 %v930, 4294901760
        %932 = vmatpush1.xpose.msra.mxu0 %v931
        %v933 = vand.u32 %v290, 4294901760
        %v934 = vsub.f32 %v290, %v933
        %v935 = vand.u32 %v934, 4294901760
        %936 = vmatprep.subr.mxu0 %v935
        %v937 = vand.u32 %v289, 4294901760
        %v938 = vsub.f32 %v289, %v937
        %v939 = vand.u32 %v938, 4294901760
        %940 = vmatpush1.xpose.msra.mxu0 %v939
        %v941 = vand.u32 %v288, 4294901760
        %v942 = vsub.f32 %v288, %v941
        %v943 = vand.u32 %v942, 4294901760
        %944 = vmatprep.subr.mxu0 %v943
        %v945 = vand.u32 %v287, 4294901760
        %v946 = vsub.f32 %v287, %v945
        %v947 = vand.u32 %v946, 4294901760
        %948 = vmatpush1.xpose.msra.mxu0 %v947
        %v949 = vand.u32 %v286, 4294901760
        %v950 = vsub.f32 %v286, %v949
        %v951 = vand.u32 %v950, 4294901760
        %952 = vmatprep.subr.mxu0 %v951
        %v953 = vand.u32 %v285, 4294901760
        %v954 = vsub.f32 %v285, %v953
        %v955 = vand.u32 %v954, 4294901760
        %956 = vmatpush1.xpose.msra.mxu0 %v955
        %v957 = vand.u32 %v284, 4294901760
        %v958 = vsub.f32 %v284, %v957
        %v959 = vand.u32 %v958, 4294901760
        %960 = vmatprep.subr.mxu0 %v959
        %v961 = vand.u32 %v283, 4294901760
        %v962 = vsub.f32 %v283, %v961
        %v963 = vand.u32 %v962, 4294901760
        %964 = vmatpush1.xpose.msra.mxu0 %v963
        %v965 = vand.u32 %v282, 4294901760
        %v966 = vsub.f32 %v282, %v965
        %v967 = vand.u32 %v966, 4294901760
        %968 = vmatprep.subr.mxu0 %v967
        %v969 = vand.u32 %v281, 4294901760
        %v970 = vsub.f32 %v281, %v969
        %v971 = vand.u32 %v970, 4294901760
        %972 = vmatpush1.xpose.msra.mxu0 %v971
        %v973 = vand.u32 %v280, 4294901760
        %v974 = vsub.f32 %v280, %v973
        %v975 = vand.u32 %v974, 4294901760
        %976 = vmatprep.subr.mxu0 %v975
        %v977 = vand.u32 %v279, 4294901760
        %v978 = vsub.f32 %v279, %v977
        %v979 = vand.u32 %v978, 4294901760
        %980 = vmatpush1.xpose.msra.mxu0 %v979
        %v981 = vand.u32 %v278, 4294901760
        %v982 = vsub.f32 %v278, %v981
        %v983 = vand.u32 %v982, 4294901760
        %984 = vmatprep.subr.mxu0 %v983
        %v985 = vand.u32 %v277, 4294901760
        %v986 = vsub.f32 %v277, %v985
        %v987 = vand.u32 %v986, 4294901760
        %988 = vmatpush1.xpose.msra.mxu0 %v987
        %v989 = vand.u32 %v276, 4294901760
        %v990 = vsub.f32 %v276, %v989
        %v991 = vand.u32 %v990, 4294901760
        %992 = vmatprep.subr.mxu0 %v991
        %v993 = vand.u32 %v275, 4294901760
        %v994 = vsub.f32 %v275, %v993
        %v995 = vand.u32 %v994, 4294901760
        %996 = vmatpush1.xpose.msra.mxu0 %v995
        %v997 = vand.u32 %v274, 4294901760
        %v998 = vsub.f32 %v274, %v997
        %v999 = vand.u32 %v998, 4294901760
        %1000 = vmatprep.subr.mxu0 %v999
        %v1001 = vand.u32 %v273, 4294901760
        %v1002 = vsub.f32 %v273, %v1001
        %v1003 = vand.u32 %v1002, 4294901760
        %1004 = vmatpush1.xpose.msra.mxu0 %v1003
        %v1005 = vand.u32 %v272, 4294901760
        %v1006 = vsub.f32 %v272, %v1005
        %v1007 = vand.u32 %v1006, 4294901760
        %1008 = vmatprep.subr.mxu0 %v1007
        %v1009 = vand.u32 %v271, 4294901760
        %v1010 = vsub.f32 %v271, %v1009
        %v1011 = vand.u32 %v1010, 4294901760
        %1012 = vmatpush1.xpose.msra.mxu0 %v1011
        %v1013 = vand.u32 %v270, 4294901760
        %v1014 = vsub.f32 %v270, %v1013
        %v1015 = vand.u32 %v1014, 4294901760
        %1016 = vmatprep.subr.mxu0 %v1015
        %v1017 = vand.u32 %v269, 4294901760
        %v1018 = vsub.f32 %v269, %v1017
        %v1019 = vand.u32 %v1018, 4294901760
        %1020 = vmatpush1.xpose.msra.mxu0 %v1019
        %1021 = vmatprep.subr.mxu0 0.0
        %1022 = vmatpush2.xpose.msra.mxu0 0.0
        %1023 = vmatprep.subr.mxu0 0.0
        %1024 = vmatpush2.xpose.msra.mxu0 0.0
        %1025 = vmatprep.subr.mxu0 0.0
        %1026 = vmatpush2.xpose.msra.mxu0 0.0
        %1027 = vmatprep.subr.mxu0 0.0
        %1028 = vmatpush2.xpose.msra.mxu0 0.0
        %1029 = vmatprep.subr.mxu0 0.0
        %1030 = vmatpush2.xpose.msra.mxu0 0.0
        %1031 = vmatprep.subr.mxu0 0.0
        %1032 = vmatpush2.xpose.msra.mxu0 0.0
        %1033 = vmatprep.subr.mxu0 0.0
        %1034 = vmatpush2.xpose.msra.mxu0 0.0
        %1035 = vmatprep.subr.mxu0 0.0
        %1036 = vmatpush2.xpose.msra.mxu0 0.0
        %1037 = vmatprep.subr.mxu0 0.0
        %1038 = vmatpush2.xpose.msra.mxu0 0.0
        %1039 = vmatprep.subr.mxu0 0.0
        %1040 = vmatpush2.xpose.msra.mxu0 0.0
        %1041 = vmatprep.subr.mxu0 0.0
        %1042 = vmatpush2.xpose.msra.mxu0 0.0
        %1043 = vmatprep.subr.mxu0 0.0
        %1044 = vmatpush2.xpose.msra.mxu0 0.0
        %1045 = vmatprep.subr.mxu0 0.0
        %1046 = vmatpush2.xpose.msra.mxu0 0.0
        %1047 = vmatprep.subr.mxu0 0.0
        %1048 = vmatpush2.xpose.msra.mxu0 0.0
        %1049 = vmatprep.subr.mxu0 0.0
        %1050 = vmatpush2.xpose.msra.mxu0 0.0
        %1051 = vmatprep.subr.mxu0 0.0
        %1052 = vmatpush2.xpose.msra.mxu0 0.0
        %v1053 = vand.u32 %v302, 4294901760
        %1054 = vmatprep.mubr.f32.mxu0 %v1053
        %v1055 = vand.u32 %v301, 4294901760
        %1056 = vmatmul.mubr.f32.gmra.mxu0 %v1055
        %v1057 = vpop.f32.mrf.mxu0
        %v1058 = vadd.f32 %v890, %v1057
        %v1059 = vpop.f32.mrf.mxu0
        %1060 = vdwg.mxu0
        %v1061 = vand.u32 %v300, 4294901760
        %1062 = vmatprep.subr.mxu0 %v1061
        %v1063 = vand.u32 %v299, 4294901760
        %1064 = vmatpush1.xpose.msra.mxu0 %v1063
        %v1065 = vand.u32 %v298, 4294901760
        %1066 = vmatprep.subr.mxu0 %v1065
        %v1067 = vand.u32 %v297, 4294901760
        %1068 = vmatpush1.xpose.msra.mxu0 %v1067
        %v1069 = vand.u32 %v296, 4294901760
        %1070 = vmatprep.subr.mxu0 %v1069
        %v1071 = vand.u32 %v295, 4294901760
        %1072 = vmatpush1.xpose.msra.mxu0 %v1071
        %v1073 = vand.u32 %v294, 4294901760
        %1074 = vmatprep.subr.mxu0 %v1073
        %v1075 = vand.u32 %v293, 4294901760
        %1076 = vmatpush1.xpose.msra.mxu0 %v1075
        %v1077 = vand.u32 %v292, 4294901760
        %1078 = vmatprep.subr.mxu0 %v1077
        %v1079 = vand.u32 %v291, 4294901760
        %1080 = vmatpush1.xpose.msra.mxu0 %v1079
        %v1081 = vand.u32 %v290, 4294901760
        %1082 = vmatprep.subr.mxu0 %v1081
        %v1083 = vand.u32 %v289, 4294901760
        %1084 = vmatpush1.xpose.msra.mxu0 %v1083
        %v1085 = vand.u32 %v288, 4294901760
        %1086 = vmatprep.subr.mxu0 %v1085
        %v1087 = vand.u32 %v287, 4294901760
        %1088 = vmatpush1.xpose.msra.mxu0 %v1087
        %v1089 = vand.u32 %v286, 4294901760
        %1090 = vmatprep.subr.mxu0 %v1089
        %v1091 = vand.u32 %v285, 4294901760
        %1092 = vmatpush1.xpose.msra.mxu0 %v1091
        %v1093 = vand.u32 %v284, 4294901760
        %1094 = vmatprep.subr.mxu0 %v1093
        %v1095 = vand.u32 %v283, 4294901760
        %1096 = vmatpush1.xpose.msra.mxu0 %v1095
        %v1097 = vand.u32 %v282, 4294901760
        %1098 = vmatprep.subr.mxu0 %v1097
        %v1099 = vand.u32 %v281, 4294901760
        %1100 = vmatpush1.xpose.msra.mxu0 %v1099
        %v1101 = vand.u32 %v280, 4294901760
        %1102 = vmatprep.subr.mxu0 %v1101
        %v1103 = vand.u32 %v279, 4294901760
        %1104 = vmatpush1.xpose.msra.mxu0 %v1103
        %v1105 = vand.u32 %v278, 4294901760
        %1106 = vmatprep.subr.mxu0 %v1105
        %v1107 = vand.u32 %v277, 4294901760
        %1108 = vmatpush1.xpose.msra.mxu0 %v1107
        %v1109 = vand.u32 %v276, 4294901760
        %1110 = vmatprep.subr.mxu0 %v1109
        %v1111 = vand.u32 %v275, 4294901760
        %1112 = vmatpush1.xpose.msra.mxu0 %v1111
        %v1113 = vand.u32 %v274, 4294901760
        %1114 = vmatprep.subr.mxu0 %v1113
        %v1115 = vand.u32 %v273, 4294901760
        %1116 = vmatpush1.xpose.msra.mxu0 %v1115
        %v1117 = vand.u32 %v272, 4294901760
        %1118 = vmatprep.subr.mxu0 %v1117
        %v1119 = vand.u32 %v271, 4294901760
        %1120 = vmatpush1.xpose.msra.mxu0 %v1119
        %v1121 = vand.u32 %v270, 4294901760
        %1122 = vmatprep.subr.mxu0 %v1121
        %v1123 = vand.u32 %v269, 4294901760
        %1124 = vmatpush1.xpose.msra.mxu0 %v1123
        %1125 = vmatprep.subr.mxu0 0.0
        %1126 = vmatpush2.xpose.msra.mxu0 0.0
        %1127 = vmatprep.subr.mxu0 0.0
        %1128 = vmatpush2.xpose.msra.mxu0 0.0
        %1129 = vmatprep.subr.mxu0 0.0
        %1130 = vmatpush2.xpose.msra.mxu0 0.0
        %1131 = vmatprep.subr.mxu0 0.0
        %1132 = vmatpush2.xpose.msra.mxu0 0.0
        %1133 = vmatprep.subr.mxu0 0.0
        %1134 = vmatpush2.xpose.msra.mxu0 0.0
        %1135 = vmatprep.subr.mxu0 0.0
        %1136 = vmatpush2.xpose.msra.mxu0 0.0
        %1137 = vmatprep.subr.mxu0 0.0
        %1138 = vmatpush2.xpose.msra.mxu0 0.0
        %1139 = vmatprep.subr.mxu0 0.0
        %1140 = vmatpush2.xpose.msra.mxu0 0.0
        %1141 = vmatprep.subr.mxu0 0.0
        %1142 = vmatpush2.xpose.msra.mxu0 0.0
        %1143 = vmatprep.subr.mxu0 0.0
        %1144 = vmatpush2.xpose.msra.mxu0 0.0
        %1145 = vmatprep.subr.mxu0 0.0
        %1146 = vmatpush2.xpose.msra.mxu0 0.0
        %1147 = vmatprep.subr.mxu0 0.0
        %1148 = vmatpush2.xpose.msra.mxu0 0.0
        %1149 = vmatprep.subr.mxu0 0.0
        %1150 = vmatpush2.xpose.msra.mxu0 0.0
        %1151 = vmatprep.subr.mxu0 0.0
        %1152 = vmatpush2.xpose.msra.mxu0 0.0
        %1153 = vmatprep.subr.mxu0 0.0
        %1154 = vmatpush2.xpose.msra.mxu0 0.0
        %1155 = vmatprep.subr.mxu0 0.0
        %1156 = vmatpush2.xpose.msra.mxu0 0.0
        %v1157 = vand.u32 %v302, 4294901760
        %1158 = vmatprep.mubr.f32.mxu0 %v1157
        %v1159 = vand.u32 %v301, 4294901760
        %1160 = vmatmul.mubr.f32.gmra.mxu0 %v1159
        %v1161 = vpop.f32.mrf.mxu0
        %v1162 = vadd.f32 %v1058, %v1161
        %v1163 = vpop.f32.mrf.mxu0
        %1164 = vdwg.mxu0
        %v1165 = vrsqrt.pop %v1162
        %v1166 = vmul.f32 %v1162, %v1165
        %vm1167 = vcmp.eq.f32.partialorder %v1162, inf
        %v1168 = vsel %vm1167, %v1162, %v1166
        %vm1169 = vcmp.eq.f32.partialorder %v1162, 0.0
        %v1170 = vand.u32 %v1162, 2147483648
        %v1171 = vsel %vm1169, %v1170, %v1168
        %s1172 = scalar_lea.vmem [#allocation2], %s20
        %1173 = vst [vmem:[%s1172] sm:$0x1] %v1171
        %p1174 = scmp.eq.s32.totalorder %s20, 3
        // Predicated region
        $region53: #{tpu_custom_call.1} parent=35 // pred_check
          %p1175 = pneg %p1174
        $region54: #{tpu_custom_call.1} parent=35 // pred_check_branch
          %1177 = sbr.rel (%p1175) target = $region56
        $region55: #{tpu_custom_call.1} parent=35 // pred_region
          %v1178 = vlaneseq
          %v1179 = vshrl.u32 %v1178, 7
          %v1180 = vlaneseq
          %v1181 = vand.u32 %v1180, 127
          %v1182 = vmul.u32 %v1179, 128
          %v1183 = vadd.s32 %v1182, %v1181
          %vm1184 = vcmp.lt.s32.totalorder %v1183, 512
          %v1185 = vld [vmem:[#allocation2] sm:$0xf]
          %v1186 = vsel %vm1184, %v1185, 0.0
          %vm1187 = vcmask 1043456
          %v1188 = vsel %vm1187, %v1186, 0.0
          %1189 = vadd.xlane.f32.xlu0 %v1188
          %v1190 = vpop.xlane.xlu0 %1189
          %v1191 = vrot.slane %v1190, 4
          %v1192 = vadd.f32 %v1190, %v1191
          %v1193 = vrot.slane %v1192, 2
          %v1194 = vadd.f32 %v1192, %v1193
          %v1195 = vrot.slane %v1194, 1
          %v1196 = vadd.f32 %v1194, %v1195
          %s1197 = vtos %v1196
          %s1198 = smul.f32 %s1197, 0.001953125
          %v1199 = vstv %s1198
          %v1200 = vsub.f32 %v1186, %v1199
          %v1201 = vsel %vm1184, %v1200, 0.0
          %v1202 = vmul.f32 %v1201, %v1201
          %v1203 = vsel %vm1187, %v1202, 0.0
          %1204 = vadd.xlane.f32.xlu0 %v1203
          %v1205 = vpop.xlane.xlu0 %1204
          %v1206 = vrot.slane %v1205, 4
          %v1207 = vadd.f32 %v1205, %v1206
          %v1208 = vrot.slane %v1207, 2
          %v1209 = vadd.f32 %v1207, %v1208
          %v1210 = vrot.slane %v1209, 1
          %v1211 = vadd.f32 %v1209, %v1210
          %s1212 = vtos %v1211
          %s1213 = smul.f32 %s1212, 0.001953125
          %s1214 = sadd.f32 %s1213, 1e-05
          %v1215 = vstv %s1214
          %v1216 = vrsqrt.pop %v1215
          %s1217 = vtos %v1216
          %v1218 = vstv %s1217
          %v1219 = vmul.f32 %v1201, %v1218
          %v1220 = vld [vmem:[%s3] sm:$0x1]
          %v1222 = vlaneseq
          %v1223 = vshrl.u32 %v1222, 7
          %v1224 = vsub.s32 0, %v1223
          %v1225 = vrot.slane %v1220, %v1224
          %1226 = vset.pattern.permute.xlu0 0
          %1227 = vperm.xlu0 %1226, %v1225
          %v1228 = vpop.permute.xlu0 %1227
          %v1230 = vmul.f32 %v1219, %v1228
          %1231 = vset.pattern.permute.xlu0 1
          %1232 = vperm.xlu0 %1231, %v1225
          %v1233 = vpop.permute.xlu0 %1232
          %v1235 = vadd.f32 %v1230, %v1233
          %v1236 = vld [vmem:[#allocation8] sm:$0xf]
          %v1237 = vmax.f32 %v1236, 0.0
          %v1238 = vmin.f32 %v1237, 1.0
          %v1239 = vand.u32 2147483647, %v1235
          %v1240 = vsub.f32 0.0, %v1239
          %v1241 = vmul.f32 %v1240, 1.442695
          %v1242 = vpow.pop %v1241
          %v1243 = vadd.f32 %v1242, 1.0
          %v1244 = vrcp.pop %v1243
          %vm1245 = vcmp.ge.f32.partialorder %v1235, 0.0
          %v1246 = vsel %vm1245, 1.0, %v1242
          %v1247 = vmul.f32 %v1246, %v1244
          %v1248 = vmax.f32 %v1235, 0.0
          %v1249 = vmul.f32 %v1235, %v1238
          %v1250 = vsub.f32 %v1248, %v1249
          %v1251 = vadd.f32 %v1242, 1.0
          %v1252 = vlog2.pop %v1251
          %v1253 = vmul.f32 %v1252, 0.6931472
          %v1254 = vmul.f32 -0.5, %v1242
          %v1255 = vadd.f32 %v1254, 1.0
          %v1256 = vmul.f32 %v1255, %v1242
          %v1257 = vand.u32 2147483647, %v1242
          %vm1258 = vcmp.lt.f32.partialorder %v1257, 0.0004427343
          %v1259 = vsel %vm1258, %v1256, %v1253
          %v1260 = vadd.f32 %v1250, %v1259
          %v1261 = vmul.f32 %v1247, %v1238
          %v1262 = vsub.f32 1.0, %v1247
          %v1263 = vsub.f32 1.0, %v1238
          %v1264 = vmul.f32 %v1262, %v1263
          %v1265 = vadd.f32 %v1261, %v1264
          %v1266 = vsub.f32 1.0, %v1265
          %v1267 = vmul.f32 %v1260, %v1266
          %v1268 = vmul.f32 %v1267, %v1266
          %v1269 = vsel %vm1184, %v1268, 0.0
          %v1270 = vsel %vm1187, %v1269, 0.0
          %1271 = vadd.xlane.f32.xlu0 %v1270
          %v1272 = vpop.xlane.xlu0 %1271
          %v1273 = vrot.slane %v1272, 4
          %v1274 = vadd.f32 %v1272, %v1273
          %v1275 = vrot.slane %v1274, 2
          %v1276 = vadd.f32 %v1274, %v1275
          %v1277 = vrot.slane %v1276, 1
          %v1278 = vadd.f32 %v1276, %v1277
          %s1279 = vtos %v1278
          %s1280 = smul.f32 %s1279, 0.001953125
          %v1281 = vstv %s1280
          %vm1282 = vcmask 0
          %1283 = vst.msk [vmem:[#allocation9] sm:$0x1] %vm1282, %v1281
        $region56: #{tpu_custom_call.1} parent=35 // pred_fallthru
          _
        // Predicated region
        $region57: #{tpu_custom_call.1} parent=35 // pred_check
          %p1284 = pneg %p122
        $region58: #{tpu_custom_call.1} parent=35 // pred_check_branch
          %1286 = sbr.rel (%p1284) target = $region60
        $region59: #{tpu_custom_call.1} parent=35 // pred_region
          %s1288 = ssub.s32 16, 16
          %1289 = vsyncadd [#allocation5], %s1288
          %s1291 = sshll.u32 [#allocation9], 4
          %s1292 = int_to_ptr.vmem [resolvable:$true] %s1291
          %1294 = dma.vmem_to_hbm [thread:$0]  %s1292, 16, %s4, [#allocation5]
        $region60: #{tpu_custom_call.1} parent=35 // pred_fallthru
          _
        // Predicated region
        $region61: #{tpu_custom_call.1} parent=35 // pred_check
          %p1295 = pneg %p122
        $region62: #{tpu_custom_call.1} parent=35 // pred_check_branch
          %1297 = sbr.rel (%p1295) target = $region64
        $region63: #{tpu_custom_call.1} parent=35 // pred_region
          %1298 = dma.done [#allocation5], 16
        $region64: #{tpu_custom_call.1} parent=35 // pred_fallthru
          _
      $region36: #{tpu_custom_call.1} parent=5 // pred_fallthru
        _
      %p1299 = scmp.le.s32.totalorder 2, %s15
      // Predicated region
      $region65: #{tpu_custom_call.1} parent=5 // pred_check
        %p1300 = pneg %p1299
      $region66: #{tpu_custom_call.1} parent=5 // pred_check_branch
        %1302 = sbr.rel (%p1300) target = $region68
      $region67: #{tpu_custom_call.1} parent=5 // pred_region
        %s1303 = ssub.s32 %s15, 2
      $region68: #{tpu_custom_call.1} parent=5 // pred_fallthru
        _
    $region6: #{tpu_custom_call.1} parent=1 // loop_footer
      %s19 = sadd.s32 1, %s15
    $region7: #{tpu_custom_call.1} parent=1 // loop_footer_branch
      %14 = sbr.rel target = $region3
    $region8: #{tpu_custom_call.1} parent=1 // loop_exit
      _
    %1304 = vsyncpa [#allocation4], 1
    %s1305 = scalar_lea.sflag [#allocation4], 1
    %1306 = vsyncpa %s1305, 1
    %1307 = vsyncpa [#allocation7], 1
    %1308 = vsyncpa [#allocation5], 1
    %s1309 = scalar_lea.sflag [#allocation5], 1
    %1310 = vsyncpa %s1309, 1

</llo_original>
